<compile_context>
chip_gen: v6e
topology: v6e:2x2x1
jax: 0.10.0
libtpu: 0.0.40
codegen_flags: <defaults>
</compile_context>

<pallas_src>
import functools
import numpy as np
import jax
import jax.numpy as jnp
from jax.experimental import pallas as pl
from jax.experimental.pallas import tpu as pltpu

D_MODEL = 24
NHEAD = 2
CF = 2  # compression_factor


# ------------------------------ fused kernel ------------------------------- #

def _fused_attn_kernel(k_ref, q_ref, v_ref, wk_ref, wq_ref, wv_ref,
                       asel_ref, wc_ref, bc_ref, nk_ref, nv_ref,
                       wo_ref, bo_ref, o_ref,
                       *, b, t, d, h, cf, tc, rs, scale):
    dh = d // h
    f32 = jnp.float32
    trans_b = (((1,), (1,)), ((), ()))  # x @ W.T without materializing the transpose

    def dot_t(x, w):
        return jax.lax.dot_general(x, w, trans_b, preferred_element_type=f32)

    def dot(x, w):
        return jnp.dot(x, w, preferred_element_type=f32)

    kx = k_ref[...]  # (b*t, d)  rows in (batch, time) order
    qx = q_ref[...]
    vx = v_ref[...]

    # Q/K/V projections (bias-free in the reference); fold d_model**-0.5 into Q once.
    K = dot_t(kx, wk_ref[...])
    Q = dot_t(qx, wq_ref[...]) * scale
    V = dot_t(vx, wv_ref[...])

    # Grouped Conv1d(kernel=cf, stride=cf, groups=h) with the always-applied
    # prepended zero padding, as per-tap matmuls shared by K and V:
    #     Xc = bconv + sum_kk (A_kk @ X) @ Wc_kk
    # A_kk is a constant block-diagonal (over batch) 0/1 selection matrix that also
    # encodes the padding; Wc_kk embeds the channel-group structure (zeros outside
    # each group).  Row blocks are sublane(8)-aligned via the `rs` stride.
    bc = bc_ref[...]                                   # (1, d)
    Kc_all = jnp.broadcast_to(bc, (b * rs, d))
    Vc_all = jnp.broadcast_to(bc, (b * rs, d))
    for kk in range(cf):
        A_kk = asel_ref[pl.ds(kk * b * rs, b * rs), :]  # (b*rs, b*t), aligned start
        W_kk = wc_ref[pl.ds(kk * d, d), :]              # (d, d),      aligned start
        Kc_all = Kc_all + dot(dot(A_kk, K), W_kk)
        Vc_all = Vc_all + dot(dot(A_kk, V), W_kk)

    nk = nk_ref[...]  # (1, d) null_k
    nv = nv_ref[...]  # (1, d) null_v
    wo = wo_ref[...]  # (d, d) torch (out, in)
    bo_full = jnp.broadcast_to(bo_ref[...], (t, d))     # hoisted (not re-broadcast per iter)

    # Attention for every (batch, head) pair, fully unrolled (b*h = 4 tiny blocks).
    # NOTE: the reference's softmax is dead code (overwritten by dropout(dots));
    # eval-mode dropout is identity, so weights == raw scaled dots.
    for i in range(b):
        Q_b = Q[i * t:(i + 1) * t]              # (t, d)   aligned (t == 8)
        Kc_b = Kc_all[i * rs:i * rs + tc]       # (tc, d)  aligned start
        Vc_b = Vc_all[i * rs:i * rs + tc]

        out_proj = bo_full
        for g in range(h):
            sl = slice(g * dh, (g + 1) * dh)
            q_h = Q_b[:, sl]                    # (t, dh)   (scale already folded in)
            dots_c = dot_t(q_h, Kc_b[:, sl])    # (t, tc)   raw scaled dots
            dots_n = dot_t(q_h, nk[:, sl])      # (t, 1)    null_k column
            out_h = dot(dots_c, Vc_b[:, sl]) + dots_n * nv[:, sl]   # (t, dh)
            # output projection x @ Wout.T, split along Wout's input-feature columns
            out_proj = out_proj + dot_t(out_h, wo[:, sl])
        o_ref[pl.ds(i * t, t), :] = out_proj


# ------------------------------- forward pass ------------------------------ #

def customized_attn_forward(k_in, q_in, v_in, params):
    """k_in, q_in, v_in: (seq, batch, d_model) -> (seq, batch, d_model)."""
    t, b, d = k_in.shape
    h, cf = NHEAD, CF
    padding = cf - t % cf          # reference ALWAYS applies this (== cf when divisible)
    tc = (t + padding) // cf       # compressed length (before the null row)
    rs = ((tc + 7) // 8) * 8       # sublane-aligned per-batch row stride for compressed slabs
    scale = float(d) ** -0.5       # reference scales by d_model, not head_dim

    # Constant 0/1 selection matrices (one per conv tap, block-diagonal over batch)
    # encoding both the prepended zero padding and the stride-cf windowing.
    asel = np.zeros((cf * b * rs, b * t), np.float32)
    for kk in range(cf):
        for i in range(b):
            for j in range(tc):
                p = j * cf + kk - padding
                if 0 <= p < t:
                    asel[(kk * b + i) * rs + j, i * t + p] = 1.0
    asel = jnp.asarray(asel)

    # (seq, batch, d) -> rows in (batch, time) order (single cheap layout copy each).
    to_bt = lambda x: jnp.transpose(x, (1, 0, 2)).reshape(b * t, d)

    kernel = functools.partial(_fused_attn_kernel, b=b, t=t, d=d, h=h,
                               cf=cf, tc=tc, rs=rs, scale=scale)
    full = lambda shape: pl.BlockSpec(shape, lambda _: (0,) * len(shape))

    out = pl.pallas_call(
        kernel,
        out_shape=jax.ShapeDtypeStruct((b * t, d), jnp.float32),
        grid=(1,),
        in_specs=[
            full((b * t, d)), full((b * t, d)), full((b * t, d)),
            full((d, d)), full((d, d)), full((d, d)),
            full((cf * b * rs, b * t)), full((cf * d, d)), full((1, d)),
            full((1, d)), full((1, d)),
            full((d, d)), full((1, d)),
        ],
        out_specs=full((b * t, d)),
        compiler_params=pltpu.CompilerParams(dimension_semantics=("arbitrary",)),
    )(to_bt(k_in), to_bt(q_in), to_bt(v_in),
      params["Wk"], params["Wq"], params["Wv"],
      asel, params["Wconv_full"], params["bconv"].reshape(1, d),
      params["null_k"].reshape(1, d), params["null_v"].reshape(1, d),
      params["Wout"], params["bout"].reshape(1, d))

    return out.reshape(b, t, d).transpose(1, 0, 2)  # (seq, batch, d)


# ------------------------------ parameter setup ----------------------------- #

def build_params(key):
    d, h, cf = D_MODEL, NHEAD, CF
    dg = d // h
    ks = jax.random.split(key, 7)
    init = lambda kk, shape: jax.random.normal(kk, shape, jnp.float32) * 0.1

    Wk = init(ks[0], (d, d))            # nn.Linear weight (out, in), no bias
    Wq = init(ks[1], (d, d))
    Wv = init(ks[2], (d, d))
    Wout = init(ks[3], (d, d))
    bout = init(ks[4], (d,))
    conv_w = init(ks[5], (d, dg, cf))   # Conv1d weight: (out_ch, in_ch/groups, kernel)
    bconv = init(ks[6], (d,))

    # Expand the grouped conv into per-tap dense (d, d) blocks stacked as (cf*d, d):
    # Wc[kk*d + c, o] = conv_w[o, c - group(o)*dg, kk] (zero outside the group).
    cw = np.asarray(conv_w)
    Wc = np.zeros((cf * d, d), dtype=np.float32)
    for o in range(d):
        g = o // dg
        for cl in range(dg):
            c = g * dg + cl
            for kk in range(cf):
                Wc[kk * d + c, o] = cw[o, cl, kk]

    return {
        "Wk": Wk, "Wq": Wq, "Wv": Wv,
        "Wout": Wout, "bout": bout,
        "conv_w": conv_w, "bconv": bconv,
        "Wconv_full": jnp.asarray(Wc),
        # null_k / null_v are zero-initialized trainable params in the reference.
        "null_k": jnp.zeros((1, 1, d), jnp.float32),
        "null_v": jnp.zeros((1, 1, d), jnp.float32),
    }


# ------------------------------ pure-JAX reference -------------------------- #

def reference_forward(k_in, q_in, v_in, params):
    t, b, d = k_in.shape
    h, cf = NHEAD, CF
    dh = d // h
    k = jnp.transpose(k_in, (1, 0, 2))
    q = jnp.transpose(q_in, (1, 0, 2))
    v = jnp.transpose(v_in, (1, 0, 2))
    K = k @ params["Wk"].T
    Q = q @ params["Wq"].T
    V = v @ params["Wv"].T
    padding = cf - t % cf
    K = jnp.pad(K, ((0, 0), (padding, 0), (0, 0)))
    V = jnp.pad(V, ((0, 0), (padding, 0), (0, 0)))

    def compress(x):
        xc = jnp.transpose(x, (0, 2, 1))  # NCW
        y = jax.lax.conv_general_dilated(
            xc, params["conv_w"], window_strides=(cf,), padding="VALID",
            dimension_numbers=("NCH", "OIH", "NCH"), feature_group_count=h)
        return jnp.transpose(y + params["bconv"][None, :, None], (0, 2, 1))

    Kc = jnp.concatenate(
        [jnp.broadcast_to(params["null_k"], (b, 1, d)), compress(K)], axis=1)
    Vc = jnp.concatenate(
        [jnp.broadcast_to(params["null_v"], (b, 1, d)), compress(V)], axis=1)
    Qh = Q.reshape(b, t, h, dh).transpose(0, 2, 1, 3)
    Kh = Kc.reshape(b, -1, h, dh).transpose(0, 2, 1, 3)
    Vh = Vc.reshape(b, -1, h, dh).transpose(0, 2, 1, 3)
    dots = jnp.einsum("bhid,bhjd->bhij", Qh, Kh) * float(d) ** -0.5
    attn = dots  # softmax is dead code in the reference; eval-dropout is identity
    out = jnp.einsum("bhij,bhjd->bhid", attn, Vh)
    out = out.transpose(0, 2, 1, 3).reshape(b, t, d)
    out = out @ params["Wout"].T + params["bout"]
    return out.transpose(1, 0, 2)


# ----------------------------------- main ----------------------------------- #

if __name__ == "__main__":
    t, b, d = 8, 2, D_MODEL
    key = jax.random.PRNGKey(0)
    k_key, q_key, v_key, p_key = jax.random.split(key, 4)
    k_in = jax.random.normal(k_key, (t, b, d), jnp.float32)
    q_in = jax.random.normal(q_key, (t, b, d), jnp.float32)
    v_in = jax.random.normal(v_key, (t, b, d), jnp.float32)
    params = build_params(p_key)

    fwd = jax.jit(customized_attn_forward)
    out = jax.block_until_ready(fwd(k_in, q_in, v_in, params))
    assert out.shape == (t, b, d)

    ref = jax.block_until_ready(reference_forward(k_in, q_in, v_in, params))
    np.testing.assert_allclose(np.asarray(out), np.asarray(ref), rtol=1e-4, atol=1e-4)
    print("KERNEL_OK")
</pallas_src>

<mosaic_0001>
module attributes {stable_mosaic.version = 11 : i64} {
  func.func @_fused_attn_kernel(%arg0: i32, %arg1: memref<16x24xf32, #tpu.memory_space<vmem>>, %arg2: memref<16x24xf32, #tpu.memory_space<vmem>>, %arg3: memref<16x24xf32, #tpu.memory_space<vmem>>, %arg4: memref<24x24xf32, #tpu.memory_space<vmem>>, %arg5: memref<24x24xf32, #tpu.memory_space<vmem>>, %arg6: memref<24x24xf32, #tpu.memory_space<vmem>>, %arg7: memref<32x16xf32, #tpu.memory_space<vmem>>, %arg8: memref<48x24xf32, #tpu.memory_space<vmem>>, %arg9: memref<1x24xf32, #tpu.memory_space<vmem>>, %arg10: memref<1x24xf32, #tpu.memory_space<vmem>>, %arg11: memref<1x24xf32, #tpu.memory_space<vmem>>, %arg12: memref<24x24xf32, #tpu.memory_space<vmem>>, %arg13: memref<1x24xf32, #tpu.memory_space<vmem>>, %arg14: memref<16x24xf32, #tpu.memory_space<vmem>>) attributes {dimension_semantics = [#tpu.dimension_semantics<arbitrary>], iteration_bounds = array<i64: 1>, scalar_prefetch = 0 : i64, scratch_operands = 0 : i64, tpu.core_type = #tpu.core_type<tc>, window_params = [{pipeline_mode = #tpu.pipeline_mode<synchronous>, transform_indices = @transform_0, window_bounds = array<i64: 16, 24>}, {pipeline_mode = #tpu.pipeline_mode<synchronous>, transform_indices = @transform_1, window_bounds = array<i64: 16, 24>}, {pipeline_mode = #tpu.pipeline_mode<synchronous>, transform_indices = @transform_2, window_bounds = array<i64: 16, 24>}, {pipeline_mode = #tpu.pipeline_mode<synchronous>, transform_indices = @transform_3, window_bounds = array<i64: 24, 24>}, {pipeline_mode = #tpu.pipeline_mode<synchronous>, transform_indices = @transform_4, window_bounds = array<i64: 24, 24>}, {pipeline_mode = #tpu.pipeline_mode<synchronous>, transform_indices = @transform_5, window_bounds = array<i64: 24, 24>}, {pipeline_mode = #tpu.pipeline_mode<synchronous>, transform_indices = @transform_6, window_bounds = array<i64: 32, 16>}, {pipeline_mode = #tpu.pipeline_mode<synchronous>, transform_indices = @transform_7, window_bounds = array<i64: 48, 24>}, {pipeline_mode = #tpu.pipeline_mode<synchronous>, transform_indices = @transform_8, window_bounds = array<i64: 1, 24>}, {pipeline_mode = #tpu.pipeline_mode<synchronous>, transform_indices = @transform_9, window_bounds = array<i64: 1, 24>}, {pipeline_mode = #tpu.pipeline_mode<synchronous>, transform_indices = @transform_10, window_bounds = array<i64: 1, 24>}, {pipeline_mode = #tpu.pipeline_mode<synchronous>, transform_indices = @transform_11, window_bounds = array<i64: 24, 24>}, {pipeline_mode = #tpu.pipeline_mode<synchronous>, transform_indices = @transform_12, window_bounds = array<i64: 1, 24>}, {pipeline_mode = #tpu.pipeline_mode<synchronous>, transform_indices = @transform_13, window_bounds = array<i64: 16, 24>}]} {
    %c0 = arith.constant 0 : index
    %c0_0 = arith.constant 0 : index
    %0 = vector.load %arg1[%c0, %c0_0] : memref<16x24xf32, #tpu.memory_space<vmem>>, vector<16x24xf32>
    %c0_1 = arith.constant 0 : index
    %c0_2 = arith.constant 0 : index
    %1 = vector.load %arg2[%c0_1, %c0_2] : memref<16x24xf32, #tpu.memory_space<vmem>>, vector<16x24xf32>
    %c0_3 = arith.constant 0 : index
    %c0_4 = arith.constant 0 : index
    %2 = vector.load %arg3[%c0_3, %c0_4] : memref<16x24xf32, #tpu.memory_space<vmem>>, vector<16x24xf32>
    %c0_5 = arith.constant 0 : index
    %c0_6 = arith.constant 0 : index
    %3 = vector.load %arg4[%c0_5, %c0_6] : memref<24x24xf32, #tpu.memory_space<vmem>>, vector<24x24xf32>
    %cst = arith.constant dense<0.000000e+00> : vector<16x24xf32>
    %4 = tpu.matmul %0, %3, %cst {dimension_numbers = #tpu.dot_dimension_numbers<[1], [1], [0], [0], [0, 0, 1, 0], [], []>} : vector<16x24xf32>, vector<24x24xf32>, vector<16x24xf32> -> vector<16x24xf32>
    %c0_7 = arith.constant 0 : index
    %c0_8 = arith.constant 0 : index
    %5 = vector.load %arg5[%c0_7, %c0_8] : memref<24x24xf32, #tpu.memory_space<vmem>>, vector<24x24xf32>
    %cst_9 = arith.constant dense<0.000000e+00> : vector<16x24xf32>
    %6 = tpu.matmul %1, %5, %cst_9 {dimension_numbers = #tpu.dot_dimension_numbers<[1], [1], [0], [0], [0, 0, 1, 0], [], []>} : vector<16x24xf32>, vector<24x24xf32>, vector<16x24xf32> -> vector<16x24xf32>
    %cst_10 = arith.constant 0.204124153 : f32
    %7 = vector.broadcast %cst_10 : f32 to vector<16x24xf32>
    %8 = arith.mulf %6, %7 : vector<16x24xf32>
    %c0_11 = arith.constant 0 : index
    %c0_12 = arith.constant 0 : index
    %9 = vector.load %arg6[%c0_11, %c0_12] : memref<24x24xf32, #tpu.memory_space<vmem>>, vector<24x24xf32>
    %cst_13 = arith.constant dense<0.000000e+00> : vector<16x24xf32>
    %10 = tpu.matmul %2, %9, %cst_13 {dimension_numbers = #tpu.dot_dimension_numbers<[1], [1], [0], [0], [0, 0, 1, 0], [], []>} : vector<16x24xf32>, vector<24x24xf32>, vector<16x24xf32> -> vector<16x24xf32>
    %c0_14 = arith.constant 0 : index
    %c0_15 = arith.constant 0 : index
    %11 = vector.load %arg9[%c0_14, %c0_15] : memref<1x24xf32, #tpu.memory_space<vmem>>, vector<1x24xf32>
    %12 = vector.shape_cast %11 : vector<1x24xf32> to vector<1x24xf32>
    %13 = vector.broadcast %12 : vector<1x24xf32> to vector<16x24xf32>
    %14 = vector.shape_cast %11 : vector<1x24xf32> to vector<1x24xf32>
    %15 = vector.broadcast %14 : vector<1x24xf32> to vector<16x24xf32>
    %c0_16 = arith.constant 0 : index
    %c0_17 = arith.constant 0 : index
    %16 = vector.load %arg7[%c0_16, %c0_17] : memref<32x16xf32, #tpu.memory_space<vmem>>, vector<16x16xf32>
    %c0_18 = arith.constant 0 : index
    %c0_19 = arith.constant 0 : index
    %17 = vector.load %arg8[%c0_18, %c0_19] : memref<48x24xf32, #tpu.memory_space<vmem>>, vector<24x24xf32>
    %cst_20 = arith.constant dense<0.000000e+00> : vector<16x24xf32>
    %18 = tpu.matmul %16, %4, %cst_20 {dimension_numbers = #tpu.dot_dimension_numbers<[1], [0], [0], [1], [0, 0, 1, 1], [], []>} : vector<16x16xf32>, vector<16x24xf32>, vector<16x24xf32> -> vector<16x24xf32>
    %cst_21 = arith.constant dense<0.000000e+00> : vector<16x24xf32>
    %19 = tpu.matmul %18, %17, %cst_21 {dimension_numbers = #tpu.dot_dimension_numbers<[1], [0], [0], [1], [0, 0, 1, 1], [], []>} : vector<16x24xf32>, vector<24x24xf32>, vector<16x24xf32> -> vector<16x24xf32>
    %20 = arith.addf %13, %19 : vector<16x24xf32>
    %cst_22 = arith.constant dense<0.000000e+00> : vector<16x24xf32>
    %21 = tpu.matmul %16, %10, %cst_22 {dimension_numbers = #tpu.dot_dimension_numbers<[1], [0], [0], [1], [0, 0, 1, 1], [], []>} : vector<16x16xf32>, vector<16x24xf32>, vector<16x24xf32> -> vector<16x24xf32>
    %cst_23 = arith.constant dense<0.000000e+00> : vector<16x24xf32>
    %22 = tpu.matmul %21, %17, %cst_23 {dimension_numbers = #tpu.dot_dimension_numbers<[1], [0], [0], [1], [0, 0, 1, 1], [], []>} : vector<16x24xf32>, vector<24x24xf32>, vector<16x24xf32> -> vector<16x24xf32>
    %23 = arith.addf %15, %22 : vector<16x24xf32>
    %c16 = arith.constant 16 : index
    %c0_24 = arith.constant 0 : index
    %24 = vector.load %arg7[%c16, %c0_24] : memref<32x16xf32, #tpu.memory_space<vmem>>, vector<16x16xf32>
    %c24 = arith.constant 24 : index
    %c0_25 = arith.constant 0 : index
    %25 = vector.load %arg8[%c24, %c0_25] : memref<48x24xf32, #tpu.memory_space<vmem>>, vector<24x24xf32>
    %cst_26 = arith.constant dense<0.000000e+00> : vector<16x24xf32>
    %26 = tpu.matmul %24, %4, %cst_26 {dimension_numbers = #tpu.dot_dimension_numbers<[1], [0], [0], [1], [0, 0, 1, 1], [], []>} : vector<16x16xf32>, vector<16x24xf32>, vector<16x24xf32> -> vector<16x24xf32>
    %cst_27 = arith.constant dense<0.000000e+00> : vector<16x24xf32>
    %27 = tpu.matmul %26, %25, %cst_27 {dimension_numbers = #tpu.dot_dimension_numbers<[1], [0], [0], [1], [0, 0, 1, 1], [], []>} : vector<16x24xf32>, vector<24x24xf32>, vector<16x24xf32> -> vector<16x24xf32>
    %28 = arith.addf %20, %27 : vector<16x24xf32>
    %cst_28 = arith.constant dense<0.000000e+00> : vector<16x24xf32>
    %29 = tpu.matmul %24, %10, %cst_28 {dimension_numbers = #tpu.dot_dimension_numbers<[1], [0], [0], [1], [0, 0, 1, 1], [], []>} : vector<16x16xf32>, vector<16x24xf32>, vector<16x24xf32> -> vector<16x24xf32>
    %cst_29 = arith.constant dense<0.000000e+00> : vector<16x24xf32>
    %30 = tpu.matmul %29, %25, %cst_29 {dimension_numbers = #tpu.dot_dimension_numbers<[1], [0], [0], [1], [0, 0, 1, 1], [], []>} : vector<16x24xf32>, vector<24x24xf32>, vector<16x24xf32> -> vector<16x24xf32>
    %31 = arith.addf %23, %30 : vector<16x24xf32>
    %c0_30 = arith.constant 0 : index
    %c0_31 = arith.constant 0 : index
    %32 = vector.load %arg10[%c0_30, %c0_31] : memref<1x24xf32, #tpu.memory_space<vmem>>, vector<1x24xf32>
    %c0_32 = arith.constant 0 : index
    %c0_33 = arith.constant 0 : index
    %33 = vector.load %arg11[%c0_32, %c0_33] : memref<1x24xf32, #tpu.memory_space<vmem>>, vector<1x24xf32>
    %c0_34 = arith.constant 0 : index
    %c0_35 = arith.constant 0 : index
    %34 = vector.load %arg12[%c0_34, %c0_35] : memref<24x24xf32, #tpu.memory_space<vmem>>, vector<24x24xf32>
    %c0_36 = arith.constant 0 : index
    %c0_37 = arith.constant 0 : index
    %35 = vector.load %arg13[%c0_36, %c0_37] : memref<1x24xf32, #tpu.memory_space<vmem>>, vector<1x24xf32>
    %36 = vector.shape_cast %35 : vector<1x24xf32> to vector<1x24xf32>
    %37 = vector.broadcast %36 : vector<1x24xf32> to vector<8x24xf32>
    %38 = vector.extract_strided_slice %8 {offsets = [0, 0], sizes = [8, 24], strides = [1, 1]} : vector<16x24xf32> to vector<8x24xf32>
    %39 = vector.extract_strided_slice %28 {offsets = [0, 0], sizes = [5, 24], strides = [1, 1]} : vector<16x24xf32> to vector<5x24xf32>
    %40 = vector.extract_strided_slice %31 {offsets = [0, 0], sizes = [5, 24], strides = [1, 1]} : vector<16x24xf32> to vector<5x24xf32>
    %41 = vector.extract_strided_slice %38 {offsets = [0, 0], sizes = [8, 12], strides = [1, 1]} : vector<8x24xf32> to vector<8x12xf32>
    %42 = vector.extract_strided_slice %39 {offsets = [0, 0], sizes = [5, 12], strides = [1, 1]} : vector<5x24xf32> to vector<5x12xf32>
    %cst_38 = arith.constant dense<0.000000e+00> : vector<8x5xf32>
    %43 = tpu.matmul %41, %42, %cst_38 {dimension_numbers = #tpu.dot_dimension_numbers<[1], [1], [0], [0], [0, 0, 1, 0], [], []>} : vector<8x12xf32>, vector<5x12xf32>, vector<8x5xf32> -> vector<8x5xf32>
    %44 = vector.extract_strided_slice %32 {offsets = [0, 0], sizes = [1, 12], strides = [1, 1]} : vector<1x24xf32> to vector<1x12xf32>
    %cst_39 = arith.constant dense<0.000000e+00> : vector<8x1xf32>
    %45 = tpu.matmul %41, %44, %cst_39 {dimension_numbers = #tpu.dot_dimension_numbers<[1], [1], [0], [0], [0, 0, 1, 0], [], []>} : vector<8x12xf32>, vector<1x12xf32>, vector<8x1xf32> -> vector<8x1xf32>
    %46 = vector.extract_strided_slice %40 {offsets = [0, 0], sizes = [5, 12], strides = [1, 1]} : vector<5x24xf32> to vector<5x12xf32>
    %cst_40 = arith.constant dense<0.000000e+00> : vector<8x12xf32>
    %47 = tpu.matmul %43, %46, %cst_40 {dimension_numbers = #tpu.dot_dimension_numbers<[1], [0], [0], [1], [0, 0, 1, 1], [], []>} : vector<8x5xf32>, vector<5x12xf32>, vector<8x12xf32> -> vector<8x12xf32>
    %48 = vector.extract_strided_slice %33 {offsets = [0, 0], sizes = [1, 12], strides = [1, 1]} : vector<1x24xf32> to vector<1x12xf32>
    %49 = vector.broadcast %45 : vector<8x1xf32> to vector<8x12xf32>
    %50 = vector.broadcast %48 : vector<1x12xf32> to vector<8x12xf32>
    %51 = arith.mulf %49, %50 : vector<8x12xf32>
    %52 = arith.addf %47, %51 : vector<8x12xf32>
    %53 = vector.extract_strided_slice %34 {offsets = [0, 0], sizes = [24, 12], strides = [1, 1]} : vector<24x24xf32> to vector<24x12xf32>
    %cst_41 = arith.constant dense<0.000000e+00> : vector<8x24xf32>
    %54 = tpu.matmul %52, %53, %cst_41 {dimension_numbers = #tpu.dot_dimension_numbers<[1], [1], [0], [0], [0, 0, 1, 0], [], []>} : vector<8x12xf32>, vector<24x12xf32>, vector<8x24xf32> -> vector<8x24xf32>
    %55 = arith.addf %37, %54 : vector<8x24xf32>
    %56 = vector.extract_strided_slice %38 {offsets = [0, 12], sizes = [8, 12], strides = [1, 1]} : vector<8x24xf32> to vector<8x12xf32>
    %57 = vector.extract_strided_slice %39 {offsets = [0, 12], sizes = [5, 12], strides = [1, 1]} : vector<5x24xf32> to vector<5x12xf32>
    %cst_42 = arith.constant dense<0.000000e+00> : vector<8x5xf32>
    %58 = tpu.matmul %56, %57, %cst_42 {dimension_numbers = #tpu.dot_dimension_numbers<[1], [1], [0], [0], [0, 0, 1, 0], [], []>} : vector<8x12xf32>, vector<5x12xf32>, vector<8x5xf32> -> vector<8x5xf32>
    %59 = vector.extract_strided_slice %32 {offsets = [0, 12], sizes = [1, 12], strides = [1, 1]} : vector<1x24xf32> to vector<1x12xf32>
    %cst_43 = arith.constant dense<0.000000e+00> : vector<8x1xf32>
    %60 = tpu.matmul %56, %59, %cst_43 {dimension_numbers = #tpu.dot_dimension_numbers<[1], [1], [0], [0], [0, 0, 1, 0], [], []>} : vector<8x12xf32>, vector<1x12xf32>, vector<8x1xf32> -> vector<8x1xf32>
    %61 = vector.extract_strided_slice %40 {offsets = [0, 12], sizes = [5, 12], strides = [1, 1]} : vector<5x24xf32> to vector<5x12xf32>
    %cst_44 = arith.constant dense<0.000000e+00> : vector<8x12xf32>
    %62 = tpu.matmul %58, %61, %cst_44 {dimension_numbers = #tpu.dot_dimension_numbers<[1], [0], [0], [1], [0, 0, 1, 1], [], []>} : vector<8x5xf32>, vector<5x12xf32>, vector<8x12xf32> -> vector<8x12xf32>
    %63 = vector.extract_strided_slice %33 {offsets = [0, 12], sizes = [1, 12], strides = [1, 1]} : vector<1x24xf32> to vector<1x12xf32>
    %64 = vector.broadcast %60 : vector<8x1xf32> to vector<8x12xf32>
    %65 = vector.broadcast %63 : vector<1x12xf32> to vector<8x12xf32>
    %66 = arith.mulf %64, %65 : vector<8x12xf32>
    %67 = arith.addf %62, %66 : vector<8x12xf32>
    %68 = vector.extract_strided_slice %34 {offsets = [0, 12], sizes = [24, 12], strides = [1, 1]} : vector<24x24xf32> to vector<24x12xf32>
    %cst_45 = arith.constant dense<0.000000e+00> : vector<8x24xf32>
    %69 = tpu.matmul %67, %68, %cst_45 {dimension_numbers = #tpu.dot_dimension_numbers<[1], [1], [0], [0], [0, 0, 1, 0], [], []>} : vector<8x12xf32>, vector<24x12xf32>, vector<8x24xf32> -> vector<8x24xf32>
    %70 = arith.addf %55, %69 : vector<8x24xf32>
    %c0_46 = arith.constant 0 : index
    %c0_47 = arith.constant 0 : index
    %71 = vector.load %arg14[%c0_46, %c0_47] : memref<16x24xf32, #tpu.memory_space<vmem>>, vector<8x24xf32>
    tpu.vector_store %arg14[%c0_46, %c0_47], %70 {strides = array<i32>} : memref<16x24xf32, #tpu.memory_space<vmem>>, vector<8x24xf32>,
    %72 = vector.extract_strided_slice %8 {offsets = [8, 0], sizes = [8, 24], strides = [1, 1]} : vector<16x24xf32> to vector<8x24xf32>
    %73 = vector.extract_strided_slice %28 {offsets = [8, 0], sizes = [5, 24], strides = [1, 1]} : vector<16x24xf32> to vector<5x24xf32>
    %74 = vector.extract_strided_slice %31 {offsets = [8, 0], sizes = [5, 24], strides = [1, 1]} : vector<16x24xf32> to vector<5x24xf32>
    %75 = vector.extract_strided_slice %72 {offsets = [0, 0], sizes = [8, 12], strides = [1, 1]} : vector<8x24xf32> to vector<8x12xf32>
    %76 = vector.extract_strided_slice %73 {offsets = [0, 0], sizes = [5, 12], strides = [1, 1]} : vector<5x24xf32> to vector<5x12xf32>
    %cst_48 = arith.constant dense<0.000000e+00> : vector<8x5xf32>
    %77 = tpu.matmul %75, %76, %cst_48 {dimension_numbers = #tpu.dot_dimension_numbers<[1], [1], [0], [0], [0, 0, 1, 0], [], []>} : vector<8x12xf32>, vector<5x12xf32>, vector<8x5xf32> -> vector<8x5xf32>
    %78 = vector.extract_strided_slice %32 {offsets = [0, 0], sizes = [1, 12], strides = [1, 1]} : vector<1x24xf32> to vector<1x12xf32>
    %cst_49 = arith.constant dense<0.000000e+00> : vector<8x1xf32>
    %79 = tpu.matmul %75, %78, %cst_49 {dimension_numbers = #tpu.dot_dimension_numbers<[1], [1], [0], [0], [0, 0, 1, 0], [], []>} : vector<8x12xf32>, vector<1x12xf32>, vector<8x1xf32> -> vector<8x1xf32>
    %80 = vector.extract_strided_slice %74 {offsets = [0, 0], sizes = [5, 12], strides = [1, 1]} : vector<5x24xf32> to vector<5x12xf32>
    %cst_50 = arith.constant dense<0.000000e+00> : vector<8x12xf32>
    %81 = tpu.matmul %77, %80, %cst_50 {dimension_numbers = #tpu.dot_dimension_numbers<[1], [0], [0], [1], [0, 0, 1, 1], [], []>} : vector<8x5xf32>, vector<5x12xf32>, vector<8x12xf32> -> vector<8x12xf32>
    %82 = vector.extract_strided_slice %33 {offsets = [0, 0], sizes = [1, 12], strides = [1, 1]} : vector<1x24xf32> to vector<1x12xf32>
    %83 = vector.broadcast %79 : vector<8x1xf32> to vector<8x12xf32>
    %84 = vector.broadcast %82 : vector<1x12xf32> to vector<8x12xf32>
    %85 = arith.mulf %83, %84 : vector<8x12xf32>
    %86 = arith.addf %81, %85 : vector<8x12xf32>
    %87 = vector.extract_strided_slice %34 {offsets = [0, 0], sizes = [24, 12], strides = [1, 1]} : vector<24x24xf32> to vector<24x12xf32>
    %cst_51 = arith.constant dense<0.000000e+00> : vector<8x24xf32>
    %88 = tpu.matmul %86, %87, %cst_51 {dimension_numbers = #tpu.dot_dimension_numbers<[1], [1], [0], [0], [0, 0, 1, 0], [], []>} : vector<8x12xf32>, vector<24x12xf32>, vector<8x24xf32> -> vector<8x24xf32>
    %89 = arith.addf %37, %88 : vector<8x24xf32>
    %90 = vector.extract_strided_slice %72 {offsets = [0, 12], sizes = [8, 12], strides = [1, 1]} : vector<8x24xf32> to vector<8x12xf32>
    %91 = vector.extract_strided_slice %73 {offsets = [0, 12], sizes = [5, 12], strides = [1, 1]} : vector<5x24xf32> to vector<5x12xf32>
    %cst_52 = arith.constant dense<0.000000e+00> : vector<8x5xf32>
    %92 = tpu.matmul %90, %91, %cst_52 {dimension_numbers = #tpu.dot_dimension_numbers<[1], [1], [0], [0], [0, 0, 1, 0], [], []>} : vector<8x12xf32>, vector<5x12xf32>, vector<8x5xf32> -> vector<8x5xf32>
    %93 = vector.extract_strided_slice %32 {offsets = [0, 12], sizes = [1, 12], strides = [1, 1]} : vector<1x24xf32> to vector<1x12xf32>
    %cst_53 = arith.constant dense<0.000000e+00> : vector<8x1xf32>
    %94 = tpu.matmul %90, %93, %cst_53 {dimension_numbers = #tpu.dot_dimension_numbers<[1], [1], [0], [0], [0, 0, 1, 0], [], []>} : vector<8x12xf32>, vector<1x12xf32>, vector<8x1xf32> -> vector<8x1xf32>
    %95 = vector.extract_strided_slice %74 {offsets = [0, 12], sizes = [5, 12], strides = [1, 1]} : vector<5x24xf32> to vector<5x12xf32>
    %cst_54 = arith.constant dense<0.000000e+00> : vector<8x12xf32>
    %96 = tpu.matmul %92, %95, %cst_54 {dimension_numbers = #tpu.dot_dimension_numbers<[1], [0], [0], [1], [0, 0, 1, 1], [], []>} : vector<8x5xf32>, vector<5x12xf32>, vector<8x12xf32> -> vector<8x12xf32>
    %97 = vector.extract_strided_slice %33 {offsets = [0, 12], sizes = [1, 12], strides = [1, 1]} : vector<1x24xf32> to vector<1x12xf32>
    %98 = vector.broadcast %94 : vector<8x1xf32> to vector<8x12xf32>
    %99 = vector.broadcast %97 : vector<1x12xf32> to vector<8x12xf32>
    %100 = arith.mulf %98, %99 : vector<8x12xf32>
    %101 = arith.addf %96, %100 : vector<8x12xf32>
    %102 = vector.extract_strided_slice %34 {offsets = [0, 12], sizes = [24, 12], strides = [1, 1]} : vector<24x24xf32> to vector<24x12xf32>
    %cst_55 = arith.constant dense<0.000000e+00> : vector<8x24xf32>
    %103 = tpu.matmul %101, %102, %cst_55 {dimension_numbers = #tpu.dot_dimension_numbers<[1], [1], [0], [0], [0, 0, 1, 0], [], []>} : vector<8x12xf32>, vector<24x12xf32>, vector<8x24xf32> -> vector<8x24xf32>
    %104 = arith.addf %89, %103 : vector<8x24xf32>
    %c8 = arith.constant 8 : index
    %c0_56 = arith.constant 0 : index
    %105 = vector.load %arg14[%c8, %c0_56] : memref<16x24xf32, #tpu.memory_space<vmem>>, vector<8x24xf32>
    tpu.vector_store %arg14[%c8, %c0_56], %104 {strides = array<i32>} : memref<16x24xf32, #tpu.memory_space<vmem>>, vector<8x24xf32>,
    return
  }
  func.func @transform_0(%arg0: i32) -> (i32, i32) {
    %c0_i32 = arith.constant 0 : i32
    %c0_i32_0 = arith.constant 0 : i32
    %c0_i32_1 = arith.constant 0 : i32
    return %c0_i32, %c0_i32_0 : i32, i32
  }
  func.func @transform_1(%arg0: i32) -> (i32, i32) {
    %c0_i32 = arith.constant 0 : i32
    %c0_i32_0 = arith.constant 0 : i32
    %c0_i32_1 = arith.constant 0 : i32
    return %c0_i32, %c0_i32_0 : i32, i32
  }
  func.func @transform_2(%arg0: i32) -> (i32, i32) {
    %c0_i32 = arith.constant 0 : i32
    %c0_i32_0 = arith.constant 0 : i32
    %c0_i32_1 = arith.constant 0 : i32
    return %c0_i32, %c0_i32_0 : i32, i32
  }
  func.func @transform_3(%arg0: i32) -> (i32, i32) {
    %c0_i32 = arith.constant 0 : i32
    %c0_i32_0 = arith.constant 0 : i32
    %c0_i32_1 = arith.constant 0 : i32
    return %c0_i32, %c0_i32_0 : i32, i32
  }
  func.func @transform_4(%arg0: i32) -> (i32, i32) {
    %c0_i32 = arith.constant 0 : i32
    %c0_i32_0 = arith.constant 0 : i32
    %c0_i32_1 = arith.constant 0 : i32
    return %c0_i32, %c0_i32_0 : i32, i32
  }
  func.func @transform_5(%arg0: i32) -> (i32, i32) {
    %c0_i32 = arith.constant 0 : i32
    %c0_i32_0 = arith.constant 0 : i32
    %c0_i32_1 = arith.constant 0 : i32
    return %c0_i32, %c0_i32_0 : i32, i32
  }
  func.func @transform_6(%arg0: i32) -> (i32, i32) {
    %c0_i32 = arith.constant 0 : i32
    %c0_i32_0 = arith.constant 0 : i32
    %c0_i32_1 = arith.constant 0 : i32
    return %c0_i32, %c0_i32_0 : i32, i32
  }
  func.func @transform_7(%arg0: i32) -> (i32, i32) {
    %c0_i32 = arith.constant 0 : i32
    %c0_i32_0 = arith.constant 0 : i32
    %c0_i32_1 = arith.constant 0 : i32
    return %c0_i32, %c0_i32_0 : i32, i32
  }
  func.func @transform_8(%arg0: i32) -> (i32, i32) {
    %c0_i32 = arith.constant 0 : i32
    %c0_i32_0 = arith.constant 0 : i32
    %c0_i32_1 = arith.constant 0 : i32
    return %c0_i32, %c0_i32_0 : i32, i32
  }
  func.func @transform_9(%arg0: i32) -> (i32, i32) {
    %c0_i32 = arith.constant 0 : i32
    %c0_i32_0 = arith.constant 0 : i32
    %c0_i32_1 = arith.constant 0 : i32
    return %c0_i32, %c0_i32_0 : i32, i32
  }
  func.func @transform_10(%arg0: i32) -> (i32, i32) {
    %c0_i32 = arith.constant 0 : i32
    %c0_i32_0 = arith.constant 0 : i32
    %c0_i32_1 = arith.constant 0 : i32
    return %c0_i32, %c0_i32_0 : i32, i32
  }
  func.func @transform_11(%arg0: i32) -> (i32, i32) {
    %c0_i32 = arith.constant 0 : i32
    %c0_i32_0 = arith.constant 0 : i32
    %c0_i32_1 = arith.constant 0 : i32
    return %c0_i32, %c0_i32_0 : i32, i32
  }
  func.func @transform_12(%arg0: i32) -> (i32, i32) {
    %c0_i32 = arith.constant 0 : i32
    %c0_i32_0 = arith.constant 0 : i32
    %c0_i32_1 = arith.constant 0 : i32
    return %c0_i32, %c0_i32_0 : i32, i32
  }
  func.func @transform_13(%arg0: i32) -> (i32, i32) {
    %c0_i32 = arith.constant 0 : i32
    %c0_i32_0 = arith.constant 0 : i32
    %c0_i32_1 = arith.constant 0 : i32
    return %c0_i32, %c0_i32_0 : i32, i32
  }
}

</mosaic_0001>

<llo_original>
// kernel: customized_attn_forward.1
$region0: #{customized_attn_forward.1}
  #allocation0 [shape = 'u32[]', space=smem, size = 0x4, offset = 0x4, fixed_abs, tag = 'smem constant byte address 0x4 - core index']
  #allocation1 [shape = 'u32[144,128]{1,0:T(1,128)}', space=vmem, size = 0x12000, scoped, tag = 'internal scratch']
  %s0 = inlined_call_operand.vmem [shape: f32[16,24], index: 0, kind: input, shape index: {}]
  %s1 = inlined_call_operand.vmem [shape: f32[16,24], index: 1, kind: input, shape index: {}]
  %s2 = inlined_call_operand.vmem [shape: f32[16,24], index: 2, kind: input, shape index: {}]
  %s3 = inlined_call_operand.vmem [shape: f32[24,24], index: 3, kind: input, shape index: {}]
  %s4 = inlined_call_operand.vmem [shape: f32[24,24], index: 4, kind: input, shape index: {}]
  %s5 = inlined_call_operand.vmem [shape: f32[24,24], index: 5, kind: input, shape index: {}]
  %s6 = inlined_call_operand.vmem [shape: f32[32,16], index: 6, kind: input, shape index: {}]
  %s7 = inlined_call_operand.vmem [shape: f32[48,24], index: 7, kind: input, shape index: {}]
  %s8 = inlined_call_operand.vmem [shape: f32[1,24], index: 8, kind: input, shape index: {}]
  %s9 = inlined_call_operand.vmem [shape: f32[1,24], index: 9, kind: input, shape index: {}]
  %s10 = inlined_call_operand.vmem [shape: f32[1,24], index: 10, kind: input, shape index: {}]
  %s11 = inlined_call_operand.vmem [shape: f32[24,24], index: 11, kind: input, shape index: {}]
  %s12 = inlined_call_operand.vmem [shape: f32[1,24], index: 12, kind: input, shape index: {}]
  %s13 = inlined_call_operand.vmem [shape: f32[16,24], index: 13, kind: output, shape index: {}]
  %s14 = sld [smem:[#allocation0]]
  $region62: #{customized_attn_forward.1} parent=0
    _
  %s16 = ssub.s32 1, %s14
  %s17 = scalar_select 0, %s16, %s14
  // Predicated region
  $region2: #{customized_attn_forward.1} parent=0 // pred_check
    _
  $region3: #{customized_attn_forward.1} parent=0 // pred_check_branch
    %19 = sbr.rel (0) target = $region5
  $region4: #{customized_attn_forward.1} parent=0 // pred_region
    _
  $region5: #{customized_attn_forward.1} parent=0 // pred_fallthru
    _
  // Predicated region
  $region6: #{customized_attn_forward.1} parent=0 // pred_check
    _
  $region7: #{customized_attn_forward.1} parent=0 // pred_check_branch
    %21 = sbr.rel (0) target = $region9
  $region8: #{customized_attn_forward.1} parent=0 // pred_region
    _
  $region9: #{customized_attn_forward.1} parent=0 // pred_fallthru
    _
  // Predicated region
  $region10: #{customized_attn_forward.1} parent=0 // pred_check
    _
  $region11: #{customized_attn_forward.1} parent=0 // pred_check_branch
    %23 = sbr.rel (0) target = $region13
  $region12: #{customized_attn_forward.1} parent=0 // pred_region
    _
  $region13: #{customized_attn_forward.1} parent=0 // pred_fallthru
    _
  // Predicated region
  $region14: #{customized_attn_forward.1} parent=0 // pred_check
    _
  $region15: #{customized_attn_forward.1} parent=0 // pred_check_branch
    %25 = sbr.rel (0) target = $region17
  $region16: #{customized_attn_forward.1} parent=0 // pred_region
    _
  $region17: #{customized_attn_forward.1} parent=0 // pred_fallthru
    _
  // Predicated region
  $region18: #{customized_attn_forward.1} parent=0 // pred_check
    _
  $region19: #{customized_attn_forward.1} parent=0 // pred_check_branch
    %27 = sbr.rel (0) target = $region21
  $region20: #{customized_attn_forward.1} parent=0 // pred_region
    _
  $region21: #{customized_attn_forward.1} parent=0 // pred_fallthru
    _
  // Predicated region
  $region22: #{customized_attn_forward.1} parent=0 // pred_check
    _
  $region23: #{customized_attn_forward.1} parent=0 // pred_check_branch
    %29 = sbr.rel (0) target = $region25
  $region24: #{customized_attn_forward.1} parent=0 // pred_region
    _
  $region25: #{customized_attn_forward.1} parent=0 // pred_fallthru
    _
  // Predicated region
  $region26: #{customized_attn_forward.1} parent=0 // pred_check
    _
  $region27: #{customized_attn_forward.1} parent=0 // pred_check_branch
    %31 = sbr.rel (0) target = $region29
  $region28: #{customized_attn_forward.1} parent=0 // pred_region
    _
  $region29: #{customized_attn_forward.1} parent=0 // pred_fallthru
    _
  // Predicated region
  $region30: #{customized_attn_forward.1} parent=0 // pred_check
    _
  $region31: #{customized_attn_forward.1} parent=0 // pred_check_branch
    %33 = sbr.rel (0) target = $region33
  $region32: #{customized_attn_forward.1} parent=0 // pred_region
    _
  $region33: #{customized_attn_forward.1} parent=0 // pred_fallthru
    _
  // Predicated region
  $region34: #{customized_attn_forward.1} parent=0 // pred_check
    _
  $region35: #{customized_attn_forward.1} parent=0 // pred_check_branch
    %35 = sbr.rel (0) target = $region37
  $region36: #{customized_attn_forward.1} parent=0 // pred_region
    _
  $region37: #{customized_attn_forward.1} parent=0 // pred_fallthru
    _
  // Predicated region
  $region38: #{customized_attn_forward.1} parent=0 // pred_check
    _
  $region39: #{customized_attn_forward.1} parent=0 // pred_check_branch
    %37 = sbr.rel (0) target = $region41
  $region40: #{customized_attn_forward.1} parent=0 // pred_region
    _
  $region41: #{customized_attn_forward.1} parent=0 // pred_fallthru
    _
  // Predicated region
  $region42: #{customized_attn_forward.1} parent=0 // pred_check
    _
  $region43: #{customized_attn_forward.1} parent=0 // pred_check_branch
    %39 = sbr.rel (0) target = $region45
  $region44: #{customized_attn_forward.1} parent=0 // pred_region
    _
  $region45: #{customized_attn_forward.1} parent=0 // pred_fallthru
    _
  // Predicated region
  $region46: #{customized_attn_forward.1} parent=0 // pred_check
    _
  $region47: #{customized_attn_forward.1} parent=0 // pred_check_branch
    %41 = sbr.rel (0) target = $region49
  $region48: #{customized_attn_forward.1} parent=0 // pred_region
    _
  $region49: #{customized_attn_forward.1} parent=0 // pred_fallthru
    _
  // Predicated region
  $region50: #{customized_attn_forward.1} parent=0 // pred_check
    _
  $region51: #{customized_attn_forward.1} parent=0 // pred_check_branch
    %43 = sbr.rel (0) target = $region53
  $region52: #{customized_attn_forward.1} parent=0 // pred_region
    _
  $region53: #{customized_attn_forward.1} parent=0 // pred_fallthru
    _
  %v44 = vld [vmem:[%s0] sm:$0xff]
  %v45 = vld [vmem:[%s0 + $0x8] sm:$0xff]
  %v46 = vld [vmem:[%s1] sm:$0xff]
  %v47 = vld [vmem:[%s1 + $0x8] sm:$0xff]
  %v48 = vld [vmem:[%s2] sm:$0xff]
  %v49 = vld [vmem:[%s2 + $0x8] sm:$0xff]
  %v50 = vld [vmem:[%s3] sm:$0xff]
  %v51 = vld [vmem:[%s3 + $0x8] sm:$0xff]
  %v52 = vld [vmem:[%s3 + $0x10] sm:$0xff]
  %vm53 = vcmask 195584
  %v55 = vsel %vm53, %v44, 0
  %v58 = vsel %vm53, %v45, 0
  %v61 = vsel %vm53, %v50, 0
  %v64 = vsel %vm53, %v51, 0
  %v67 = vsel %vm53, %v52, 0
  %69 = vmatprep.subr.mxu0 0.0
  %70 = vmatpush1.xpose.msra.mxu0 0.0
  %71 = vmatprep.subr.mxu0 0.0
  %72 = vmatpush1.xpose.msra.mxu0 0.0
  %73 = vmatprep.subr.mxu0 0.0
  %74 = vmatpush1.xpose.msra.mxu0 0.0
  %75 = vmatprep.subr.mxu0 0.0
  %76 = vmatpush1.xpose.msra.mxu0 0.0
  %77 = vmatprep.subr.mxu0 0.0
  %78 = vmatpush1.xpose.msra.mxu0 0.0
  %79 = vmatprep.subr.mxu0 0.0
  %80 = vmatpush1.xpose.msra.mxu0 0.0
  %81 = vmatprep.subr.mxu0 0.0
  %82 = vmatpush1.xpose.msra.mxu0 0.0
  %83 = vmatprep.subr.mxu0 0.0
  %84 = vmatpush1.xpose.msra.mxu0 0.0
  %85 = vmatprep.subr.mxu0 0.0
  %86 = vmatpush1.xpose.msra.mxu0 0.0
  %87 = vmatprep.subr.mxu0 0.0
  %88 = vmatpush1.xpose.msra.mxu0 0.0
  %89 = vmatprep.subr.mxu0 0.0
  %90 = vmatpush1.xpose.msra.mxu0 0.0
  %91 = vmatprep.subr.mxu0 0.0
  %92 = vmatpush1.xpose.msra.mxu0 0.0
  %93 = vmatprep.subr.mxu0 0.0
  %94 = vmatpush1.xpose.msra.mxu0 0.0
  %95 = vmatprep.subr.mxu0 0.0
  %96 = vmatpush1.xpose.msra.mxu0 %v67
  %97 = vmatprep.subr.mxu0 0.0
  %98 = vmatpush1.xpose.msra.mxu0 %v64
  %99 = vmatprep.subr.mxu0 0.0
  %100 = vmatpush1.xpose.msra.mxu0 %v61
  %101 = vmatprep.subr.mxu0 0.0
  %102 = vmatpush2.xpose.msra.mxu0 0.0
  %103 = vmatprep.subr.mxu0 0.0
  %104 = vmatpush2.xpose.msra.mxu0 0.0
  %105 = vmatprep.subr.mxu0 0.0
  %106 = vmatpush2.xpose.msra.mxu0 0.0
  %107 = vmatprep.subr.mxu0 0.0
  %108 = vmatpush2.xpose.msra.mxu0 0.0
  %109 = vmatprep.subr.mxu0 0.0
  %110 = vmatpush2.xpose.msra.mxu0 0.0
  %111 = vmatprep.subr.mxu0 0.0
  %112 = vmatpush2.xpose.msra.mxu0 0.0
  %113 = vmatprep.subr.mxu0 0.0
  %114 = vmatpush2.xpose.msra.mxu0 0.0
  %115 = vmatprep.subr.mxu0 0.0
  %116 = vmatpush2.xpose.msra.mxu0 0.0
  %117 = vmatprep.subr.mxu0 0.0
  %118 = vmatpush2.xpose.msra.mxu0 0.0
  %119 = vmatprep.subr.mxu0 0.0
  %120 = vmatpush2.xpose.msra.mxu0 0.0
  %121 = vmatprep.subr.mxu0 0.0
  %122 = vmatpush2.xpose.msra.mxu0 0.0
  %123 = vmatprep.subr.mxu0 0.0
  %124 = vmatpush2.xpose.msra.mxu0 0.0
  %125 = vmatprep.subr.mxu0 0.0
  %126 = vmatpush2.xpose.msra.mxu0 0.0
  %127 = vmatprep.subr.mxu0 0.0
  %128 = vmatpush2.xpose.msra.mxu0 0.0
  %129 = vmatprep.subr.mxu0 0.0
  %130 = vmatpush2.xpose.msra.mxu0 0.0
  %131 = vmatprep.subr.mxu0 0.0
  %132 = vmatpush2.xpose.msra.mxu0 0.0
  %133 = vmatprep.mubr.f32.mxu0 0.0
  %134 = vmatmul.mubr.f32.gmra.mxu0 %v55
  %v135 = vpop.f32.mrf.mxu0
  %v136 = vadd.f32 0.0, %v135
  %v137 = vpop.f32.mrf.mxu0
  %138 = vmatprep.mubr.f32.mxu0 0.0
  %139 = vmatmul.mubr.f32.gmra.mxu0 %v58
  %v140 = vpop.f32.mrf.mxu0
  %v141 = vadd.f32 0.0, %v140
  %v142 = vpop.f32.mrf.mxu0
  %143 = vdwg.mxu0
  %v144 = vld [vmem:[%s4] sm:$0xff]
  %v145 = vld [vmem:[%s4 + $0x8] sm:$0xff]
  %v146 = vld [vmem:[%s4 + $0x10] sm:$0xff]
  %v148 = vsel %vm53, %v46, 0
  %v151 = vsel %vm53, %v47, 0
  %v154 = vsel %vm53, %v144, 0
  %v157 = vsel %vm53, %v145, 0
  %v160 = vsel %vm53, %v146, 0
  %162 = vmatprep.subr.mxu0 0.0
  %163 = vmatpush1.xpose.msra.mxu0 0.0
  %164 = vmatprep.subr.mxu0 0.0
  %165 = vmatpush1.xpose.msra.mxu0 0.0
  %166 = vmatprep.subr.mxu0 0.0
  %167 = vmatpush1.xpose.msra.mxu0 0.0
  %168 = vmatprep.subr.mxu0 0.0
  %169 = vmatpush1.xpose.msra.mxu0 0.0
  %170 = vmatprep.subr.mxu0 0.0
  %171 = vmatpush1.xpose.msra.mxu0 0.0
  %172 = vmatprep.subr.mxu0 0.0
  %173 = vmatpush1.xpose.msra.mxu0 0.0
  %174 = vmatprep.subr.mxu0 0.0
  %175 = vmatpush1.xpose.msra.mxu0 0.0
  %176 = vmatprep.subr.mxu0 0.0
  %177 = vmatpush1.xpose.msra.mxu0 0.0
  %178 = vmatprep.subr.mxu0 0.0
  %179 = vmatpush1.xpose.msra.mxu0 0.0
  %180 = vmatprep.subr.mxu0 0.0
  %181 = vmatpush1.xpose.msra.mxu0 0.0
  %182 = vmatprep.subr.mxu0 0.0
  %183 = vmatpush1.xpose.msra.mxu0 0.0
  %184 = vmatprep.subr.mxu0 0.0
  %185 = vmatpush1.xpose.msra.mxu0 0.0
  %186 = vmatprep.subr.mxu0 0.0
  %187 = vmatpush1.xpose.msra.mxu0 0.0
  %188 = vmatprep.subr.mxu0 0.0
  %189 = vmatpush1.xpose.msra.mxu0 %v160
  %190 = vmatprep.subr.mxu0 0.0
  %191 = vmatpush1.xpose.msra.mxu0 %v157
  %192 = vmatprep.subr.mxu0 0.0
  %193 = vmatpush1.xpose.msra.mxu0 %v154
  %194 = vmatprep.subr.mxu0 0.0
  %195 = vmatpush2.xpose.msra.mxu0 0.0
  %196 = vmatprep.subr.mxu0 0.0
  %197 = vmatpush2.xpose.msra.mxu0 0.0
  %198 = vmatprep.subr.mxu0 0.0
  %199 = vmatpush2.xpose.msra.mxu0 0.0
  %200 = vmatprep.subr.mxu0 0.0
  %201 = vmatpush2.xpose.msra.mxu0 0.0
  %202 = vmatprep.subr.mxu0 0.0
  %203 = vmatpush2.xpose.msra.mxu0 0.0
  %204 = vmatprep.subr.mxu0 0.0
  %205 = vmatpush2.xpose.msra.mxu0 0.0
  %206 = vmatprep.subr.mxu0 0.0
  %207 = vmatpush2.xpose.msra.mxu0 0.0
  %208 = vmatprep.subr.mxu0 0.0
  %209 = vmatpush2.xpose.msra.mxu0 0.0
  %210 = vmatprep.subr.mxu0 0.0
  %211 = vmatpush2.xpose.msra.mxu0 0.0
  %212 = vmatprep.subr.mxu0 0.0
  %213 = vmatpush2.xpose.msra.mxu0 0.0
  %214 = vmatprep.subr.mxu0 0.0
  %215 = vmatpush2.xpose.msra.mxu0 0.0
  %216 = vmatprep.subr.mxu0 0.0
  %217 = vmatpush2.xpose.msra.mxu0 0.0
  %218 = vmatprep.subr.mxu0 0.0
  %219 = vmatpush2.xpose.msra.mxu0 0.0
  %220 = vmatprep.subr.mxu0 0.0
  %221 = vmatpush2.xpose.msra.mxu0 0.0
  %222 = vmatprep.subr.mxu0 0.0
  %223 = vmatpush2.xpose.msra.mxu0 0.0
  %224 = vmatprep.subr.mxu0 0.0
  %225 = vmatpush2.xpose.msra.mxu0 0.0
  %226 = vmatprep.mubr.f32.mxu0 0.0
  %227 = vmatmul.mubr.f32.gmra.mxu0 %v148
  %v228 = vpop.f32.mrf.mxu0
  %v229 = vadd.f32 0.0, %v228
  %v230 = vpop.f32.mrf.mxu0
  %231 = vmatprep.mubr.f32.mxu0 0.0
  %232 = vmatmul.mubr.f32.gmra.mxu0 %v151
  %v233 = vpop.f32.mrf.mxu0
  %v234 = vadd.f32 0.0, %v233
  %v235 = vpop.f32.mrf.mxu0
  %236 = vdwg.mxu0
  %v237 = vmul.f32 %v229, 0.20412415
  %v238 = vmul.f32 %v234, 0.20412415
  %v239 = vld [vmem:[%s5] sm:$0xff]
  %v240 = vld [vmem:[%s5 + $0x8] sm:$0xff]
  %v241 = vld [vmem:[%s5 + $0x10] sm:$0xff]
  %v243 = vsel %vm53, %v48, 0
  %v246 = vsel %vm53, %v49, 0
  %v249 = vsel %vm53, %v239, 0
  %v252 = vsel %vm53, %v240, 0
  %v255 = vsel %vm53, %v241, 0
  %257 = vmatprep.subr.mxu0 0.0
  %258 = vmatpush1.xpose.msra.mxu0 0.0
  %259 = vmatprep.subr.mxu0 0.0
  %260 = vmatpush1.xpose.msra.mxu0 0.0
  %261 = vmatprep.subr.mxu0 0.0
  %262 = vmatpush1.xpose.msra.mxu0 0.0
  %263 = vmatprep.subr.mxu0 0.0
  %264 = vmatpush1.xpose.msra.mxu0 0.0
  %265 = vmatprep.subr.mxu0 0.0
  %266 = vmatpush1.xpose.msra.mxu0 0.0
  %267 = vmatprep.subr.mxu0 0.0
  %268 = vmatpush1.xpose.msra.mxu0 0.0
  %269 = vmatprep.subr.mxu0 0.0
  %270 = vmatpush1.xpose.msra.mxu0 0.0
  %271 = vmatprep.subr.mxu0 0.0
  %272 = vmatpush1.xpose.msra.mxu0 0.0
  %273 = vmatprep.subr.mxu0 0.0
  %274 = vmatpush1.xpose.msra.mxu0 0.0
  %275 = vmatprep.subr.mxu0 0.0
  %276 = vmatpush1.xpose.msra.mxu0 0.0
  %277 = vmatprep.subr.mxu0 0.0
  %278 = vmatpush1.xpose.msra.mxu0 0.0
  %279 = vmatprep.subr.mxu0 0.0
  %280 = vmatpush1.xpose.msra.mxu0 0.0
  %281 = vmatprep.subr.mxu0 0.0
  %282 = vmatpush1.xpose.msra.mxu0 0.0
  %283 = vmatprep.subr.mxu0 0.0
  %284 = vmatpush1.xpose.msra.mxu0 %v255
  %285 = vmatprep.subr.mxu0 0.0
  %286 = vmatpush1.xpose.msra.mxu0 %v252
  %287 = vmatprep.subr.mxu0 0.0
  %288 = vmatpush1.xpose.msra.mxu0 %v249
  %289 = vmatprep.subr.mxu0 0.0
  %290 = vmatpush2.xpose.msra.mxu0 0.0
  %291 = vmatprep.subr.mxu0 0.0
  %292 = vmatpush2.xpose.msra.mxu0 0.0
  %293 = vmatprep.subr.mxu0 0.0
  %294 = vmatpush2.xpose.msra.mxu0 0.0
  %295 = vmatprep.subr.mxu0 0.0
  %296 = vmatpush2.xpose.msra.mxu0 0.0
  %297 = vmatprep.subr.mxu0 0.0
  %298 = vmatpush2.xpose.msra.mxu0 0.0
  %299 = vmatprep.subr.mxu0 0.0
  %300 = vmatpush2.xpose.msra.mxu0 0.0
  %301 = vmatprep.subr.mxu0 0.0
  %302 = vmatpush2.xpose.msra.mxu0 0.0
  %303 = vmatprep.subr.mxu0 0.0
  %304 = vmatpush2.xpose.msra.mxu0 0.0
  %305 = vmatprep.subr.mxu0 0.0
  %306 = vmatpush2.xpose.msra.mxu0 0.0
  %307 = vmatprep.subr.mxu0 0.0
  %308 = vmatpush2.xpose.msra.mxu0 0.0
  %309 = vmatprep.subr.mxu0 0.0
  %310 = vmatpush2.xpose.msra.mxu0 0.0
  %311 = vmatprep.subr.mxu0 0.0
  %312 = vmatpush2.xpose.msra.mxu0 0.0
  %313 = vmatprep.subr.mxu0 0.0
  %314 = vmatpush2.xpose.msra.mxu0 0.0
  %315 = vmatprep.subr.mxu0 0.0
  %316 = vmatpush2.xpose.msra.mxu0 0.0
  %317 = vmatprep.subr.mxu0 0.0
  %318 = vmatpush2.xpose.msra.mxu0 0.0
  %319 = vmatprep.subr.mxu0 0.0
  %320 = vmatpush2.xpose.msra.mxu0 0.0
  %321 = vmatprep.mubr.f32.mxu0 0.0
  %322 = vmatmul.mubr.f32.gmra.mxu0 %v243
  %v323 = vpop.f32.mrf.mxu0
  %v324 = vadd.f32 0.0, %v323
  %v325 = vpop.f32.mrf.mxu0
  %326 = vmatprep.mubr.f32.mxu0 0.0
  %327 = vmatmul.mubr.f32.gmra.mxu0 %v246
  %v328 = vpop.f32.mrf.mxu0
  %v329 = vadd.f32 0.0, %v328
  %v330 = vpop.f32.mrf.mxu0
  %331 = vdwg.mxu0
  %v332 = vld [vmem:[%s8] sm:$0x1]
  %v334 = vlaneseq
  %v335 = vshrl.u32 %v334, 7
  %v336 = vsub.s32 0, %v335
  %v337 = vrot.slane %v332, %v336
  %v339 = vld [vmem:[%s6] sm:$0xff]
  %v340 = vld [vmem:[%s6 + $0x8] sm:$0xff]
  %v341 = vld [vmem:[%s7] sm:$0xff]
  %v342 = vld [vmem:[%s7 + $0x8] sm:$0xff]
  %v343 = vld [vmem:[%s7 + $0x10] sm:$0xff]
  %vm344 = vcmask 130048
  %v346 = vsel %vm344, %v339, 0
  %v349 = vsel %vm344, %v340, 0
  %351 = vmatprep.subr.mxu0 0.0
  %352 = vmatpush1.msra.mxu0 0.0
  %353 = vmatprep.subr.mxu0 0.0
  %354 = vmatpush1.msra.mxu0 0.0
  %355 = vmatprep.subr.mxu0 0.0
  %356 = vmatpush1.msra.mxu0 0.0
  %357 = vmatprep.subr.mxu0 0.0
  %358 = vmatpush1.msra.mxu0 0.0
  %359 = vmatprep.subr.mxu0 0.0
  %360 = vmatpush1.msra.mxu0 0.0
  %361 = vmatprep.subr.mxu0 0.0
  %362 = vmatpush1.msra.mxu0 0.0
  %363 = vmatprep.subr.mxu0 0.0
  %364 = vmatpush1.msra.mxu0 0.0
  %365 = vmatprep.subr.mxu0 0.0
  %366 = vmatpush1.msra.mxu0 0.0
  %367 = vmatprep.subr.mxu0 0.0
  %368 = vmatpush1.msra.mxu0 0.0
  %369 = vmatprep.subr.mxu0 0.0
  %370 = vmatpush1.msra.mxu0 0.0
  %371 = vmatprep.subr.mxu0 0.0
  %372 = vmatpush1.msra.mxu0 0.0
  %373 = vmatprep.subr.mxu0 0.0
  %374 = vmatpush1.msra.mxu0 0.0
  %375 = vmatprep.subr.mxu0 0.0
  %376 = vmatpush1.msra.mxu0 0.0
  %377 = vmatprep.subr.mxu0 0.0
  %378 = vmatpush1.msra.mxu0 0.0
  %379 = vmatprep.subr.mxu0 0.0
  %380 = vmatpush1.msra.mxu0 %v141
  %381 = vmatprep.subr.mxu0 0.0
  %382 = vmatpush1.msra.mxu0 %v136
  %383 = vmatprep.subr.mxu0 0.0
  %384 = vmatpush2.msra.mxu0 0.0
  %385 = vmatprep.subr.mxu0 0.0
  %386 = vmatpush2.msra.mxu0 0.0
  %387 = vmatprep.subr.mxu0 0.0
  %388 = vmatpush2.msra.mxu0 0.0
  %389 = vmatprep.subr.mxu0 0.0
  %390 = vmatpush2.msra.mxu0 0.0
  %391 = vmatprep.subr.mxu0 0.0
  %392 = vmatpush2.msra.mxu0 0.0
  %393 = vmatprep.subr.mxu0 0.0
  %394 = vmatpush2.msra.mxu0 0.0
  %395 = vmatprep.subr.mxu0 0.0
  %396 = vmatpush2.msra.mxu0 0.0
  %397 = vmatprep.subr.mxu0 0.0
  %398 = vmatpush2.msra.mxu0 0.0
  %399 = vmatprep.subr.mxu0 0.0
  %400 = vmatpush2.msra.mxu0 0.0
  %401 = vmatprep.subr.mxu0 0.0
  %402 = vmatpush2.msra.mxu0 0.0
  %403 = vmatprep.subr.mxu0 0.0
  %404 = vmatpush2.msra.mxu0 0.0
  %405 = vmatprep.subr.mxu0 0.0
  %406 = vmatpush2.msra.mxu0 0.0
  %407 = vmatprep.subr.mxu0 0.0
  %408 = vmatpush2.msra.mxu0 0.0
  %409 = vmatprep.subr.mxu0 0.0
  %410 = vmatpush2.msra.mxu0 0.0
  %411 = vmatprep.subr.mxu0 0.0
  %412 = vmatpush2.msra.mxu0 0.0
  %413 = vmatprep.subr.mxu0 0.0
  %414 = vmatpush2.msra.mxu0 0.0
  %415 = vmatprep.mubr.f32.mxu0 0.0
  %416 = vmatmul.mubr.f32.gmra.mxu0 %v346
  %v417 = vpop.f32.mrf.mxu0
  %v418 = vadd.f32 0.0, %v417
  %v419 = vpop.f32.mrf.mxu0
  %420 = vmatprep.mubr.f32.mxu0 0.0
  %421 = vmatmul.mubr.f32.gmra.mxu0 %v349
  %v422 = vpop.f32.mrf.mxu0
  %v423 = vadd.f32 0.0, %v422
  %v424 = vpop.f32.mrf.mxu0
  %425 = vdwg.mxu0
  %v427 = vsel %vm53, %v418, 0
  %v430 = vsel %vm53, %v423, 0
  %432 = vmatprep.subr.mxu0 0.0
  %433 = vmatpush1.msra.mxu0 0.0
  %434 = vmatprep.subr.mxu0 0.0
  %435 = vmatpush1.msra.mxu0 0.0
  %436 = vmatprep.subr.mxu0 0.0
  %437 = vmatpush1.msra.mxu0 0.0
  %438 = vmatprep.subr.mxu0 0.0
  %439 = vmatpush1.msra.mxu0 0.0
  %440 = vmatprep.subr.mxu0 0.0
  %441 = vmatpush1.msra.mxu0 0.0
  %442 = vmatprep.subr.mxu0 0.0
  %443 = vmatpush1.msra.mxu0 0.0
  %444 = vmatprep.subr.mxu0 0.0
  %445 = vmatpush1.msra.mxu0 0.0
  %446 = vmatprep.subr.mxu0 0.0
  %447 = vmatpush1.msra.mxu0 0.0
  %448 = vmatprep.subr.mxu0 0.0
  %449 = vmatpush1.msra.mxu0 0.0
  %450 = vmatprep.subr.mxu0 0.0
  %451 = vmatpush1.msra.mxu0 0.0
  %452 = vmatprep.subr.mxu0 0.0
  %453 = vmatpush1.msra.mxu0 0.0
  %454 = vmatprep.subr.mxu0 0.0
  %455 = vmatpush1.msra.mxu0 0.0
  %456 = vmatprep.subr.mxu0 0.0
  %457 = vmatpush1.msra.mxu0 0.0
  %458 = vmatprep.subr.mxu0 0.0
  %459 = vmatpush1.msra.mxu0 %v343
  %460 = vmatprep.subr.mxu0 0.0
  %461 = vmatpush1.msra.mxu0 %v342
  %462 = vmatprep.subr.mxu0 0.0
  %463 = vmatpush1.msra.mxu0 %v341
  %464 = vmatprep.subr.mxu0 0.0
  %465 = vmatpush2.msra.mxu0 0.0
  %466 = vmatprep.subr.mxu0 0.0
  %467 = vmatpush2.msra.mxu0 0.0
  %468 = vmatprep.subr.mxu0 0.0
  %469 = vmatpush2.msra.mxu0 0.0
  %470 = vmatprep.subr.mxu0 0.0
  %471 = vmatpush2.msra.mxu0 0.0
  %472 = vmatprep.subr.mxu0 0.0
  %473 = vmatpush2.msra.mxu0 0.0
  %474 = vmatprep.subr.mxu0 0.0
  %475 = vmatpush2.msra.mxu0 0.0
  %476 = vmatprep.subr.mxu0 0.0
  %477 = vmatpush2.msra.mxu0 0.0
  %478 = vmatprep.subr.mxu0 0.0
  %479 = vmatpush2.msra.mxu0 0.0
  %480 = vmatprep.subr.mxu0 0.0
  %481 = vmatpush2.msra.mxu0 0.0
  %482 = vmatprep.subr.mxu0 0.0
  %483 = vmatpush2.msra.mxu0 0.0
  %484 = vmatprep.subr.mxu0 0.0
  %485 = vmatpush2.msra.mxu0 0.0
  %486 = vmatprep.subr.mxu0 0.0
  %487 = vmatpush2.msra.mxu0 0.0
  %488 = vmatprep.subr.mxu0 0.0
  %489 = vmatpush2.msra.mxu0 0.0
  %490 = vmatprep.subr.mxu0 0.0
  %491 = vmatpush2.msra.mxu0 0.0
  %492 = vmatprep.subr.mxu0 0.0
  %493 = vmatpush2.msra.mxu0 0.0
  %494 = vmatprep.subr.mxu0 0.0
  %495 = vmatpush2.msra.mxu0 0.0
  %496 = vmatprep.mubr.f32.mxu0 0.0
  %497 = vmatmul.mubr.f32.gmra.mxu0 %v427
  %v498 = vpop.f32.mrf.mxu0
  %v499 = vadd.f32 0.0, %v498
  %v500 = vpop.f32.mrf.mxu0
  %501 = vmatprep.mubr.f32.mxu0 0.0
  %502 = vmatmul.mubr.f32.gmra.mxu0 %v430
  %v503 = vpop.f32.mrf.mxu0
  %v504 = vadd.f32 0.0, %v503
  %v505 = vpop.f32.mrf.mxu0
  %506 = vdwg.mxu0
  %v507 = vadd.f32 %v337, %v499
  %v508 = vadd.f32 %v337, %v504
  %509 = vmatprep.subr.mxu0 0.0
  %510 = vmatpush1.msra.mxu0 0.0
  %511 = vmatprep.subr.mxu0 0.0
  %512 = vmatpush1.msra.mxu0 0.0
  %513 = vmatprep.subr.mxu0 0.0
  %514 = vmatpush1.msra.mxu0 0.0
  %515 = vmatprep.subr.mxu0 0.0
  %516 = vmatpush1.msra.mxu0 0.0
  %517 = vmatprep.subr.mxu0 0.0
  %518 = vmatpush1.msra.mxu0 0.0
  %519 = vmatprep.subr.mxu0 0.0
  %520 = vmatpush1.msra.mxu0 0.0
  %521 = vmatprep.subr.mxu0 0.0
  %522 = vmatpush1.msra.mxu0 0.0
  %523 = vmatprep.subr.mxu0 0.0
  %524 = vmatpush1.msra.mxu0 0.0
  %525 = vmatprep.subr.mxu0 0.0
  %526 = vmatpush1.msra.mxu0 0.0
  %527 = vmatprep.subr.mxu0 0.0
  %528 = vmatpush1.msra.mxu0 0.0
  %529 = vmatprep.subr.mxu0 0.0
  %530 = vmatpush1.msra.mxu0 0.0
  %531 = vmatprep.subr.mxu0 0.0
  %532 = vmatpush1.msra.mxu0 0.0
  %533 = vmatprep.subr.mxu0 0.0
  %534 = vmatpush1.msra.mxu0 0.0
  %535 = vmatprep.subr.mxu0 0.0
  %536 = vmatpush1.msra.mxu0 0.0
  %537 = vmatprep.subr.mxu0 0.0
  %538 = vmatpush1.msra.mxu0 %v329
  %539 = vmatprep.subr.mxu0 0.0
  %540 = vmatpush1.msra.mxu0 %v324
  %541 = vmatprep.subr.mxu0 0.0
  %542 = vmatpush2.msra.mxu0 0.0
  %543 = vmatprep.subr.mxu0 0.0
  %544 = vmatpush2.msra.mxu0 0.0
  %545 = vmatprep.subr.mxu0 0.0
  %546 = vmatpush2.msra.mxu0 0.0
  %547 = vmatprep.subr.mxu0 0.0
  %548 = vmatpush2.msra.mxu0 0.0
  %549 = vmatprep.subr.mxu0 0.0
  %550 = vmatpush2.msra.mxu0 0.0
  %551 = vmatprep.subr.mxu0 0.0
  %552 = vmatpush2.msra.mxu0 0.0
  %553 = vmatprep.subr.mxu0 0.0
  %554 = vmatpush2.msra.mxu0 0.0
  %555 = vmatprep.subr.mxu0 0.0
  %556 = vmatpush2.msra.mxu0 0.0
  %557 = vmatprep.subr.mxu0 0.0
  %558 = vmatpush2.msra.mxu0 0.0
  %559 = vmatprep.subr.mxu0 0.0
  %560 = vmatpush2.msra.mxu0 0.0
  %561 = vmatprep.subr.mxu0 0.0
  %562 = vmatpush2.msra.mxu0 0.0
  %563 = vmatprep.subr.mxu0 0.0
  %564 = vmatpush2.msra.mxu0 0.0
  %565 = vmatprep.subr.mxu0 0.0
  %566 = vmatpush2.msra.mxu0 0.0
  %567 = vmatprep.subr.mxu0 0.0
  %568 = vmatpush2.msra.mxu0 0.0
  %569 = vmatprep.subr.mxu0 0.0
  %570 = vmatpush2.msra.mxu0 0.0
  %571 = vmatprep.subr.mxu0 0.0
  %572 = vmatpush2.msra.mxu0 0.0
  %573 = vmatprep.mubr.f32.mxu0 0.0
  %574 = vmatmul.mubr.f32.gmra.mxu0 %v346
  %v575 = vpop.f32.mrf.mxu0
  %v576 = vadd.f32 0.0, %v575
  %v577 = vpop.f32.mrf.mxu0
  %578 = vmatprep.mubr.f32.mxu0 0.0
  %579 = vmatmul.mubr.f32.gmra.mxu0 %v349
  %v580 = vpop.f32.mrf.mxu0
  %v581 = vadd.f32 0.0, %v580
  %v582 = vpop.f32.mrf.mxu0
  %583 = vdwg.mxu0
  %v585 = vsel %vm53, %v576, 0
  %v588 = vsel %vm53, %v581, 0
  %590 = vmatprep.subr.mxu0 0.0
  %591 = vmatpush1.msra.mxu0 0.0
  %592 = vmatprep.subr.mxu0 0.0
  %593 = vmatpush1.msra.mxu0 0.0
  %594 = vmatprep.subr.mxu0 0.0
  %595 = vmatpush1.msra.mxu0 0.0
  %596 = vmatprep.subr.mxu0 0.0
  %597 = vmatpush1.msra.mxu0 0.0
  %598 = vmatprep.subr.mxu0 0.0
  %599 = vmatpush1.msra.mxu0 0.0
  %600 = vmatprep.subr.mxu0 0.0
  %601 = vmatpush1.msra.mxu0 0.0
  %602 = vmatprep.subr.mxu0 0.0
  %603 = vmatpush1.msra.mxu0 0.0
  %604 = vmatprep.subr.mxu0 0.0
  %605 = vmatpush1.msra.mxu0 0.0
  %606 = vmatprep.subr.mxu0 0.0
  %607 = vmatpush1.msra.mxu0 0.0
  %608 = vmatprep.subr.mxu0 0.0
  %609 = vmatpush1.msra.mxu0 0.0
  %610 = vmatprep.subr.mxu0 0.0
  %611 = vmatpush1.msra.mxu0 0.0
  %612 = vmatprep.subr.mxu0 0.0
  %613 = vmatpush1.msra.mxu0 0.0
  %614 = vmatprep.subr.mxu0 0.0
  %615 = vmatpush1.msra.mxu0 0.0
  %616 = vmatprep.subr.mxu0 0.0
  %617 = vmatpush1.msra.mxu0 %v343
  %618 = vmatprep.subr.mxu0 0.0
  %619 = vmatpush1.msra.mxu0 %v342
  %620 = vmatprep.subr.mxu0 0.0
  %621 = vmatpush1.msra.mxu0 %v341
  %622 = vmatprep.subr.mxu0 0.0
  %623 = vmatpush2.msra.mxu0 0.0
  %624 = vmatprep.subr.mxu0 0.0
  %625 = vmatpush2.msra.mxu0 0.0
  %626 = vmatprep.subr.mxu0 0.0
  %627 = vmatpush2.msra.mxu0 0.0
  %628 = vmatprep.subr.mxu0 0.0
  %629 = vmatpush2.msra.mxu0 0.0
  %630 = vmatprep.subr.mxu0 0.0
  %631 = vmatpush2.msra.mxu0 0.0
  %632 = vmatprep.subr.mxu0 0.0
  %633 = vmatpush2.msra.mxu0 0.0
  %634 = vmatprep.subr.mxu0 0.0
  %635 = vmatpush2.msra.mxu0 0.0
  %636 = vmatprep.subr.mxu0 0.0
  %637 = vmatpush2.msra.mxu0 0.0
  %638 = vmatprep.subr.mxu0 0.0
  %639 = vmatpush2.msra.mxu0 0.0
  %640 = vmatprep.subr.mxu0 0.0
  %641 = vmatpush2.msra.mxu0 0.0
  %642 = vmatprep.subr.mxu0 0.0
  %643 = vmatpush2.msra.mxu0 0.0
  %644 = vmatprep.subr.mxu0 0.0
  %645 = vmatpush2.msra.mxu0 0.0
  %646 = vmatprep.subr.mxu0 0.0
  %647 = vmatpush2.msra.mxu0 0.0
  %648 = vmatprep.subr.mxu0 0.0
  %649 = vmatpush2.msra.mxu0 0.0
  %650 = vmatprep.subr.mxu0 0.0
  %651 = vmatpush2.msra.mxu0 0.0
  %652 = vmatprep.subr.mxu0 0.0
  %653 = vmatpush2.msra.mxu0 0.0
  %654 = vmatprep.mubr.f32.mxu0 0.0
  %655 = vmatmul.mubr.f32.gmra.mxu0 %v585
  %v656 = vpop.f32.mrf.mxu0
  %v657 = vadd.f32 0.0, %v656
  %v658 = vpop.f32.mrf.mxu0
  %659 = vmatprep.mubr.f32.mxu0 0.0
  %660 = vmatmul.mubr.f32.gmra.mxu0 %v588
  %v661 = vpop.f32.mrf.mxu0
  %v662 = vadd.f32 0.0, %v661
  %v663 = vpop.f32.mrf.mxu0
  %664 = vdwg.mxu0
  %v665 = vadd.f32 %v337, %v657
  %v666 = vadd.f32 %v337, %v662
  %v667 = vld [vmem:[%s6 + $0x10] sm:$0xff]
  %v668 = vld [vmem:[%s6 + $0x18] sm:$0xff]
  %v669 = vld [vmem:[%s7 + $0x18] sm:$0xff]
  %v670 = vld [vmem:[%s7 + $0x20] sm:$0xff]
  %v671 = vld [vmem:[%s7 + $0x28] sm:$0xff]
  %v673 = vsel %vm344, %v667, 0
  %v676 = vsel %vm344, %v668, 0
  %678 = vmatprep.subr.mxu0 0.0
  %679 = vmatpush1.msra.mxu0 0.0
  %680 = vmatprep.subr.mxu0 0.0
  %681 = vmatpush1.msra.mxu0 0.0
  %682 = vmatprep.subr.mxu0 0.0
  %683 = vmatpush1.msra.mxu0 0.0
  %684 = vmatprep.subr.mxu0 0.0
  %685 = vmatpush1.msra.mxu0 0.0
  %686 = vmatprep.subr.mxu0 0.0
  %687 = vmatpush1.msra.mxu0 0.0
  %688 = vmatprep.subr.mxu0 0.0
  %689 = vmatpush1.msra.mxu0 0.0
  %690 = vmatprep.subr.mxu0 0.0
  %691 = vmatpush1.msra.mxu0 0.0
  %692 = vmatprep.subr.mxu0 0.0
  %693 = vmatpush1.msra.mxu0 0.0
  %694 = vmatprep.subr.mxu0 0.0
  %695 = vmatpush1.msra.mxu0 0.0
  %696 = vmatprep.subr.mxu0 0.0
  %697 = vmatpush1.msra.mxu0 0.0
  %698 = vmatprep.subr.mxu0 0.0
  %699 = vmatpush1.msra.mxu0 0.0
  %700 = vmatprep.subr.mxu0 0.0
  %701 = vmatpush1.msra.mxu0 0.0
  %702 = vmatprep.subr.mxu0 0.0
  %703 = vmatpush1.msra.mxu0 0.0
  %704 = vmatprep.subr.mxu0 0.0
  %705 = vmatpush1.msra.mxu0 0.0
  %706 = vmatprep.subr.mxu0 0.0
  %707 = vmatpush1.msra.mxu0 %v141
  %708 = vmatprep.subr.mxu0 0.0
  %709 = vmatpush1.msra.mxu0 %v136
  %710 = vmatprep.subr.mxu0 0.0
  %711 = vmatpush2.msra.mxu0 0.0
  %712 = vmatprep.subr.mxu0 0.0
  %713 = vmatpush2.msra.mxu0 0.0
  %714 = vmatprep.subr.mxu0 0.0
  %715 = vmatpush2.msra.mxu0 0.0
  %716 = vmatprep.subr.mxu0 0.0
  %717 = vmatpush2.msra.mxu0 0.0
  %718 = vmatprep.subr.mxu0 0.0
  %719 = vmatpush2.msra.mxu0 0.0
  %720 = vmatprep.subr.mxu0 0.0
  %721 = vmatpush2.msra.mxu0 0.0
  %722 = vmatprep.subr.mxu0 0.0
  %723 = vmatpush2.msra.mxu0 0.0
  %724 = vmatprep.subr.mxu0 0.0
  %725 = vmatpush2.msra.mxu0 0.0
  %726 = vmatprep.subr.mxu0 0.0
  %727 = vmatpush2.msra.mxu0 0.0
  %728 = vmatprep.subr.mxu0 0.0
  %729 = vmatpush2.msra.mxu0 0.0
  %730 = vmatprep.subr.mxu0 0.0
  %731 = vmatpush2.msra.mxu0 0.0
  %732 = vmatprep.subr.mxu0 0.0
  %733 = vmatpush2.msra.mxu0 0.0
  %734 = vmatprep.subr.mxu0 0.0
  %735 = vmatpush2.msra.mxu0 0.0
  %736 = vmatprep.subr.mxu0 0.0
  %737 = vmatpush2.msra.mxu0 0.0
  %738 = vmatprep.subr.mxu0 0.0
  %739 = vmatpush2.msra.mxu0 0.0
  %740 = vmatprep.subr.mxu0 0.0
  %741 = vmatpush2.msra.mxu0 0.0
  %742 = vmatprep.mubr.f32.mxu0 0.0
  %743 = vmatmul.mubr.f32.gmra.mxu0 %v673
  %v744 = vpop.f32.mrf.mxu0
  %v745 = vadd.f32 0.0, %v744
  %v746 = vpop.f32.mrf.mxu0
  %747 = vmatprep.mubr.f32.mxu0 0.0
  %748 = vmatmul.mubr.f32.gmra.mxu0 %v676
  %v749 = vpop.f32.mrf.mxu0
  %v750 = vadd.f32 0.0, %v749
  %v751 = vpop.f32.mrf.mxu0
  %752 = vdwg.mxu0
  %v754 = vsel %vm53, %v745, 0
  %v757 = vsel %vm53, %v750, 0
  %759 = vmatprep.subr.mxu0 0.0
  %760 = vmatpush1.msra.mxu0 0.0
  %761 = vmatprep.subr.mxu0 0.0
  %762 = vmatpush1.msra.mxu0 0.0
  %763 = vmatprep.subr.mxu0 0.0
  %764 = vmatpush1.msra.mxu0 0.0
  %765 = vmatprep.subr.mxu0 0.0
  %766 = vmatpush1.msra.mxu0 0.0
  %767 = vmatprep.subr.mxu0 0.0
  %768 = vmatpush1.msra.mxu0 0.0
  %769 = vmatprep.subr.mxu0 0.0
  %770 = vmatpush1.msra.mxu0 0.0
  %771 = vmatprep.subr.mxu0 0.0
  %772 = vmatpush1.msra.mxu0 0.0
  %773 = vmatprep.subr.mxu0 0.0
  %774 = vmatpush1.msra.mxu0 0.0
  %775 = vmatprep.subr.mxu0 0.0
  %776 = vmatpush1.msra.mxu0 0.0
  %777 = vmatprep.subr.mxu0 0.0
  %778 = vmatpush1.msra.mxu0 0.0
  %779 = vmatprep.subr.mxu0 0.0
  %780 = vmatpush1.msra.mxu0 0.0
  %781 = vmatprep.subr.mxu0 0.0
  %782 = vmatpush1.msra.mxu0 0.0
  %783 = vmatprep.subr.mxu0 0.0
  %784 = vmatpush1.msra.mxu0 0.0
  %785 = vmatprep.subr.mxu0 0.0
  %786 = vmatpush1.msra.mxu0 %v671
  %787 = vmatprep.subr.mxu0 0.0
  %788 = vmatpush1.msra.mxu0 %v670
  %789 = vmatprep.subr.mxu0 0.0
  %790 = vmatpush1.msra.mxu0 %v669
  %791 = vmatprep.subr.mxu0 0.0
  %792 = vmatpush2.msra.mxu0 0.0
  %793 = vmatprep.subr.mxu0 0.0
  %794 = vmatpush2.msra.mxu0 0.0
  %795 = vmatprep.subr.mxu0 0.0
  %796 = vmatpush2.msra.mxu0 0.0
  %797 = vmatprep.subr.mxu0 0.0
  %798 = vmatpush2.msra.mxu0 0.0
  %799 = vmatprep.subr.mxu0 0.0
  %800 = vmatpush2.msra.mxu0 0.0
  %801 = vmatprep.subr.mxu0 0.0
  %802 = vmatpush2.msra.mxu0 0.0
  %803 = vmatprep.subr.mxu0 0.0
  %804 = vmatpush2.msra.mxu0 0.0
  %805 = vmatprep.subr.mxu0 0.0
  %806 = vmatpush2.msra.mxu0 0.0
  %807 = vmatprep.subr.mxu0 0.0
  %808 = vmatpush2.msra.mxu0 0.0
  %809 = vmatprep.subr.mxu0 0.0
  %810 = vmatpush2.msra.mxu0 0.0
  %811 = vmatprep.subr.mxu0 0.0
  %812 = vmatpush2.msra.mxu0 0.0
  %813 = vmatprep.subr.mxu0 0.0
  %814 = vmatpush2.msra.mxu0 0.0
  %815 = vmatprep.subr.mxu0 0.0
  %816 = vmatpush2.msra.mxu0 0.0
  %817 = vmatprep.subr.mxu0 0.0
  %818 = vmatpush2.msra.mxu0 0.0
  %819 = vmatprep.subr.mxu0 0.0
  %820 = vmatpush2.msra.mxu0 0.0
  %821 = vmatprep.subr.mxu0 0.0
  %822 = vmatpush2.msra.mxu0 0.0
  %823 = vmatprep.mubr.f32.mxu0 0.0
  %824 = vmatmul.mubr.f32.gmra.mxu0 %v754
  %v825 = vpop.f32.mrf.mxu0
  %v826 = vadd.f32 0.0, %v825
  %v827 = vpop.f32.mrf.mxu0
  %828 = vmatprep.mubr.f32.mxu0 0.0
  %829 = vmatmul.mubr.f32.gmra.mxu0 %v757
  %v830 = vpop.f32.mrf.mxu0
  %v831 = vadd.f32 0.0, %v830
  %v832 = vpop.f32.mrf.mxu0
  %833 = vdwg.mxu0
  %v834 = vadd.f32 %v507, %v826
  %v835 = vadd.f32 %v508, %v831
  %836 = vmatprep.subr.mxu0 0.0
  %837 = vmatpush1.msra.mxu0 0.0
  %838 = vmatprep.subr.mxu0 0.0
  %839 = vmatpush1.msra.mxu0 0.0
  %840 = vmatprep.subr.mxu0 0.0
  %841 = vmatpush1.msra.mxu0 0.0
  %842 = vmatprep.subr.mxu0 0.0
  %843 = vmatpush1.msra.mxu0 0.0
  %844 = vmatprep.subr.mxu0 0.0
  %845 = vmatpush1.msra.mxu0 0.0
  %846 = vmatprep.subr.mxu0 0.0
  %847 = vmatpush1.msra.mxu0 0.0
  %848 = vmatprep.subr.mxu0 0.0
  %849 = vmatpush1.msra.mxu0 0.0
  %850 = vmatprep.subr.mxu0 0.0
  %851 = vmatpush1.msra.mxu0 0.0
  %852 = vmatprep.subr.mxu0 0.0
  %853 = vmatpush1.msra.mxu0 0.0
  %854 = vmatprep.subr.mxu0 0.0
  %855 = vmatpush1.msra.mxu0 0.0
  %856 = vmatprep.subr.mxu0 0.0
  %857 = vmatpush1.msra.mxu0 0.0
  %858 = vmatprep.subr.mxu0 0.0
  %859 = vmatpush1.msra.mxu0 0.0
  %860 = vmatprep.subr.mxu0 0.0
  %861 = vmatpush1.msra.mxu0 0.0
  %862 = vmatprep.subr.mxu0 0.0
  %863 = vmatpush1.msra.mxu0 0.0
  %864 = vmatprep.subr.mxu0 0.0
  %865 = vmatpush1.msra.mxu0 %v329
  %866 = vmatprep.subr.mxu0 0.0
  %867 = vmatpush1.msra.mxu0 %v324
  %868 = vmatprep.subr.mxu0 0.0
  %869 = vmatpush2.msra.mxu0 0.0
  %870 = vmatprep.subr.mxu0 0.0
  %871 = vmatpush2.msra.mxu0 0.0
  %872 = vmatprep.subr.mxu0 0.0
  %873 = vmatpush2.msra.mxu0 0.0
  %874 = vmatprep.subr.mxu0 0.0
  %875 = vmatpush2.msra.mxu0 0.0
  %876 = vmatprep.subr.mxu0 0.0
  %877 = vmatpush2.msra.mxu0 0.0
  %878 = vmatprep.subr.mxu0 0.0
  %879 = vmatpush2.msra.mxu0 0.0
  %880 = vmatprep.subr.mxu0 0.0
  %881 = vmatpush2.msra.mxu0 0.0
  %882 = vmatprep.subr.mxu0 0.0
  %883 = vmatpush2.msra.mxu0 0.0
  %884 = vmatprep.subr.mxu0 0.0
  %885 = vmatpush2.msra.mxu0 0.0
  %886 = vmatprep.subr.mxu0 0.0
  %887 = vmatpush2.msra.mxu0 0.0
  %888 = vmatprep.subr.mxu0 0.0
  %889 = vmatpush2.msra.mxu0 0.0
  %890 = vmatprep.subr.mxu0 0.0
  %891 = vmatpush2.msra.mxu0 0.0
  %892 = vmatprep.subr.mxu0 0.0
  %893 = vmatpush2.msra.mxu0 0.0
  %894 = vmatprep.subr.mxu0 0.0
  %895 = vmatpush2.msra.mxu0 0.0
  %896 = vmatprep.subr.mxu0 0.0
  %897 = vmatpush2.msra.mxu0 0.0
  %898 = vmatprep.subr.mxu0 0.0
  %899 = vmatpush2.msra.mxu0 0.0
  %900 = vmatprep.mubr.f32.mxu0 0.0
  %901 = vmatmul.mubr.f32.gmra.mxu0 %v673
  %v902 = vpop.f32.mrf.mxu0
  %v903 = vadd.f32 0.0, %v902
  %v904 = vpop.f32.mrf.mxu0
  %905 = vmatprep.mubr.f32.mxu0 0.0
  %906 = vmatmul.mubr.f32.gmra.mxu0 %v676
  %v907 = vpop.f32.mrf.mxu0
  %v908 = vadd.f32 0.0, %v907
  %v909 = vpop.f32.mrf.mxu0
  %910 = vdwg.mxu0
  %v912 = vsel %vm53, %v903, 0
  %v915 = vsel %vm53, %v908, 0
  %917 = vmatprep.subr.mxu0 0.0
  %918 = vmatpush1.msra.mxu0 0.0
  %919 = vmatprep.subr.mxu0 0.0
  %920 = vmatpush1.msra.mxu0 0.0
  %921 = vmatprep.subr.mxu0 0.0
  %922 = vmatpush1.msra.mxu0 0.0
  %923 = vmatprep.subr.mxu0 0.0
  %924 = vmatpush1.msra.mxu0 0.0
  %925 = vmatprep.subr.mxu0 0.0
  %926 = vmatpush1.msra.mxu0 0.0
  %927 = vmatprep.subr.mxu0 0.0
  %928 = vmatpush1.msra.mxu0 0.0
  %929 = vmatprep.subr.mxu0 0.0
  %930 = vmatpush1.msra.mxu0 0.0
  %931 = vmatprep.subr.mxu0 0.0
  %932 = vmatpush1.msra.mxu0 0.0
  %933 = vmatprep.subr.mxu0 0.0
  %934 = vmatpush1.msra.mxu0 0.0
  %935 = vmatprep.subr.mxu0 0.0
  %936 = vmatpush1.msra.mxu0 0.0
  %937 = vmatprep.subr.mxu0 0.0
  %938 = vmatpush1.msra.mxu0 0.0
  %939 = vmatprep.subr.mxu0 0.0
  %940 = vmatpush1.msra.mxu0 0.0
  %941 = vmatprep.subr.mxu0 0.0
  %942 = vmatpush1.msra.mxu0 0.0
  %943 = vmatprep.subr.mxu0 0.0
  %944 = vmatpush1.msra.mxu0 %v671
  %945 = vmatprep.subr.mxu0 0.0
  %946 = vmatpush1.msra.mxu0 %v670
  %947 = vmatprep.subr.mxu0 0.0
  %948 = vmatpush1.msra.mxu0 %v669
  %949 = vmatprep.subr.mxu0 0.0
  %950 = vmatpush2.msra.mxu0 0.0
  %951 = vmatprep.subr.mxu0 0.0
  %952 = vmatpush2.msra.mxu0 0.0
  %953 = vmatprep.subr.mxu0 0.0
  %954 = vmatpush2.msra.mxu0 0.0
  %955 = vmatprep.subr.mxu0 0.0
  %956 = vmatpush2.msra.mxu0 0.0
  %957 = vmatprep.subr.mxu0 0.0
  %958 = vmatpush2.msra.mxu0 0.0
  %959 = vmatprep.subr.mxu0 0.0
  %960 = vmatpush2.msra.mxu0 0.0
  %961 = vmatprep.subr.mxu0 0.0
  %962 = vmatpush2.msra.mxu0 0.0
  %963 = vmatprep.subr.mxu0 0.0
  %964 = vmatpush2.msra.mxu0 0.0
  %965 = vmatprep.subr.mxu0 0.0
  %966 = vmatpush2.msra.mxu0 0.0
  %967 = vmatprep.subr.mxu0 0.0
  %968 = vmatpush2.msra.mxu0 0.0
  %969 = vmatprep.subr.mxu0 0.0
  %970 = vmatpush2.msra.mxu0 0.0
  %971 = vmatprep.subr.mxu0 0.0
  %972 = vmatpush2.msra.mxu0 0.0
  %973 = vmatprep.subr.mxu0 0.0
  %974 = vmatpush2.msra.mxu0 0.0
  %975 = vmatprep.subr.mxu0 0.0
  %976 = vmatpush2.msra.mxu0 0.0
  %977 = vmatprep.subr.mxu0 0.0
  %978 = vmatpush2.msra.mxu0 0.0
  %979 = vmatprep.subr.mxu0 0.0
  %980 = vmatpush2.msra.mxu0 0.0
  %981 = vmatprep.mubr.f32.mxu0 0.0
  %982 = vmatmul.mubr.f32.gmra.mxu0 %v912
  %v983 = vpop.f32.mrf.mxu0
  %v984 = vadd.f32 0.0, %v983
  %v985 = vpop.f32.mrf.mxu0
  %986 = vmatprep.mubr.f32.mxu0 0.0
  %987 = vmatmul.mubr.f32.gmra.mxu0 %v915
  %v988 = vpop.f32.mrf.mxu0
  %v989 = vadd.f32 0.0, %v988
  %v990 = vpop.f32.mrf.mxu0
  %991 = vdwg.mxu0
  %v992 = vadd.f32 %v665, %v984
  %v993 = vadd.f32 %v666, %v989
  %v994 = vld [vmem:[%s9] sm:$0x1]
  %v995 = vld [vmem:[%s10] sm:$0x1]
  %v996 = vld [vmem:[%s11] sm:$0xff]
  %v997 = vld [vmem:[%s11 + $0x8] sm:$0xff]
  %v998 = vld [vmem:[%s11 + $0x10] sm:$0xff]
  %v999 = vld [vmem:[%s12] sm:$0x1]
  %v1001 = vlaneseq
  %v1002 = vshrl.u32 %v1001, 7
  %v1003 = vsub.s32 0, %v1002
  %v1004 = vrot.slane %v999, %v1003
  %vm1006 = vcmask 97280
  %v1008 = vsel %vm1006, %v237, 0
  %v1011 = vsel %vm1006, %v834, 0
  %1013 = vmatprep.subr.mxu0 0.0
  %1014 = vmatpush1.xpose.msra.mxu0 0.0
  %1015 = vmatprep.subr.mxu0 0.0
  %1016 = vmatpush1.xpose.msra.mxu0 0.0
  %1017 = vmatprep.subr.mxu0 0.0
  %1018 = vmatpush1.xpose.msra.mxu0 0.0
  %1019 = vmatprep.subr.mxu0 0.0
  %1020 = vmatpush1.xpose.msra.mxu0 0.0
  %1021 = vmatprep.subr.mxu0 0.0
  %1022 = vmatpush1.xpose.msra.mxu0 0.0
  %1023 = vmatprep.subr.mxu0 0.0
  %1024 = vmatpush1.xpose.msra.mxu0 0.0
  %1025 = vmatprep.subr.mxu0 0.0
  %1026 = vmatpush1.xpose.msra.mxu0 0.0
  %1027 = vmatprep.subr.mxu0 0.0
  %1028 = vmatpush1.xpose.msra.mxu0 0.0
  %1029 = vmatprep.subr.mxu0 0.0
  %1030 = vmatpush1.xpose.msra.mxu0 0.0
  %1031 = vmatprep.subr.mxu0 0.0
  %1032 = vmatpush1.xpose.msra.mxu0 0.0
  %1033 = vmatprep.subr.mxu0 0.0
  %1034 = vmatpush1.xpose.msra.mxu0 0.0
  %1035 = vmatprep.subr.mxu0 0.0
  %1036 = vmatpush1.xpose.msra.mxu0 0.0
  %1037 = vmatprep.subr.mxu0 0.0
  %1038 = vmatpush1.xpose.msra.mxu0 0.0
  %1039 = vmatprep.subr.mxu0 0.0
  %1040 = vmatpush1.xpose.msra.mxu0 0.0
  %1041 = vmatprep.subr.mxu0 0.0
  %1042 = vmatpush1.xpose.msra.mxu0 0.0
  %1043 = vmatprep.subr.mxu0 0.0
  %1044 = vmatpush1.xpose.msra.mxu0 %v1011
  %1045 = vmatprep.subr.mxu0 0.0
  %1046 = vmatpush2.xpose.msra.mxu0 0.0
  %1047 = vmatprep.subr.mxu0 0.0
  %1048 = vmatpush2.xpose.msra.mxu0 0.0
  %1049 = vmatprep.subr.mxu0 0.0
  %1050 = vmatpush2.xpose.msra.mxu0 0.0
  %1051 = vmatprep.subr.mxu0 0.0
  %1052 = vmatpush2.xpose.msra.mxu0 0.0
  %1053 = vmatprep.subr.mxu0 0.0
  %1054 = vmatpush2.xpose.msra.mxu0 0.0
  %1055 = vmatprep.subr.mxu0 0.0
  %1056 = vmatpush2.xpose.msra.mxu0 0.0
  %1057 = vmatprep.subr.mxu0 0.0
  %1058 = vmatpush2.xpose.msra.mxu0 0.0
  %1059 = vmatprep.subr.mxu0 0.0
  %1060 = vmatpush2.xpose.msra.mxu0 0.0
  %1061 = vmatprep.subr.mxu0 0.0
  %1062 = vmatpush2.xpose.msra.mxu0 0.0
  %1063 = vmatprep.subr.mxu0 0.0
  %1064 = vmatpush2.xpose.msra.mxu0 0.0
  %1065 = vmatprep.subr.mxu0 0.0
  %1066 = vmatpush2.xpose.msra.mxu0 0.0
  %1067 = vmatprep.subr.mxu0 0.0
  %1068 = vmatpush2.xpose.msra.mxu0 0.0
  %1069 = vmatprep.subr.mxu0 0.0
  %1070 = vmatpush2.xpose.msra.mxu0 0.0
  %1071 = vmatprep.subr.mxu0 0.0
  %1072 = vmatpush2.xpose.msra.mxu0 0.0
  %1073 = vmatprep.subr.mxu0 0.0
  %1074 = vmatpush2.xpose.msra.mxu0 0.0
  %1075 = vmatprep.subr.mxu0 0.0
  %1076 = vmatpush2.xpose.msra.mxu0 0.0
  %1077 = vmatprep.mubr.f32.mxu0 0.0
  %1078 = vmatmul.mubr.f32.gmra.mxu0 %v1008
  %v1079 = vpop.f32.mrf.mxu0
  %v1080 = vadd.f32 0.0, %v1079
  %v1081 = vpop.f32.mrf.mxu0
  %1082 = vdwg.mxu0
  %v1084 = vlaneseq
  %v1085 = vshrl.u32 %v1084, 7
  %v1086 = vsub.s32 0, %v1085
  %v1087 = vrot.slane %v994, %v1086
  %v1089 = vmul.f32 %v237, %v1087
  %v1090 = vsel %vm1006, %v1089, 0.0
  %1091 = vadd.xlane.f32.xlu0 %v1090
  %v1092 = vpop.xlane.xlu0 %1091
  %v1094 = vlaneseq
  %v1095 = vshrl.u32 %v1094, 7
  %v1096 = vsub.s32 0, %v1095
  %v1097 = vrot.slane %v995, %v1096
  %v1099 = vmul.f32 %v1092, %v1097
  %vm1100 = vcmask 39936
  %v1102 = vsel %vm1100, %v1080, 0
  %vm1104 = vcmask 1044480
  %v1106 = vsel %vm1104, %v992, 0
  %1108 = vmatprep.subr.mxu0 0.0
  %1109 = vmatpush1.msra.mxu0 0.0
  %1110 = vmatprep.subr.mxu0 0.0
  %1111 = vmatpush1.msra.mxu0 0.0
  %1112 = vmatprep.subr.mxu0 0.0
  %1113 = vmatpush1.msra.mxu0 0.0
  %1114 = vmatprep.subr.mxu0 0.0
  %1115 = vmatpush1.msra.mxu0 0.0
  %1116 = vmatprep.subr.mxu0 0.0
  %1117 = vmatpush1.msra.mxu0 0.0
  %1118 = vmatprep.subr.mxu0 0.0
  %1119 = vmatpush1.msra.mxu0 0.0
  %1120 = vmatprep.subr.mxu0 0.0
  %1121 = vmatpush1.msra.mxu0 0.0
  %1122 = vmatprep.subr.mxu0 0.0
  %1123 = vmatpush1.msra.mxu0 0.0
  %1124 = vmatprep.subr.mxu0 0.0
  %1125 = vmatpush1.msra.mxu0 0.0
  %1126 = vmatprep.subr.mxu0 0.0
  %1127 = vmatpush1.msra.mxu0 0.0
  %1128 = vmatprep.subr.mxu0 0.0
  %1129 = vmatpush1.msra.mxu0 0.0
  %1130 = vmatprep.subr.mxu0 0.0
  %1131 = vmatpush1.msra.mxu0 0.0
  %1132 = vmatprep.subr.mxu0 0.0
  %1133 = vmatpush1.msra.mxu0 0.0
  %1134 = vmatprep.subr.mxu0 0.0
  %1135 = vmatpush1.msra.mxu0 0.0
  %1136 = vmatprep.subr.mxu0 0.0
  %1137 = vmatpush1.msra.mxu0 0.0
  %1138 = vmatprep.subr.mxu0 0.0
  %1139 = vmatpush1.msra.mxu0 %v1106
  %1140 = vmatprep.subr.mxu0 0.0
  %1141 = vmatpush2.msra.mxu0 0.0
  %1142 = vmatprep.subr.mxu0 0.0
  %1143 = vmatpush2.msra.mxu0 0.0
  %1144 = vmatprep.subr.mxu0 0.0
  %1145 = vmatpush2.msra.mxu0 0.0
  %1146 = vmatprep.subr.mxu0 0.0
  %1147 = vmatpush2.msra.mxu0 0.0
  %1148 = vmatprep.subr.mxu0 0.0
  %1149 = vmatpush2.msra.mxu0 0.0
  %1150 = vmatprep.subr.mxu0 0.0
  %1151 = vmatpush2.msra.mxu0 0.0
  %1152 = vmatprep.subr.mxu0 0.0
  %1153 = vmatpush2.msra.mxu0 0.0
  %1154 = vmatprep.subr.mxu0 0.0
  %1155 = vmatpush2.msra.mxu0 0.0
  %1156 = vmatprep.subr.mxu0 0.0
  %1157 = vmatpush2.msra.mxu0 0.0
  %1158 = vmatprep.subr.mxu0 0.0
  %1159 = vmatpush2.msra.mxu0 0.0
  %1160 = vmatprep.subr.mxu0 0.0
  %1161 = vmatpush2.msra.mxu0 0.0
  %1162 = vmatprep.subr.mxu0 0.0
  %1163 = vmatpush2.msra.mxu0 0.0
  %1164 = vmatprep.subr.mxu0 0.0
  %1165 = vmatpush2.msra.mxu0 0.0
  %1166 = vmatprep.subr.mxu0 0.0
  %1167 = vmatpush2.msra.mxu0 0.0
  %1168 = vmatprep.subr.mxu0 0.0
  %1169 = vmatpush2.msra.mxu0 0.0
  %1170 = vmatprep.subr.mxu0 0.0
  %1171 = vmatpush2.msra.mxu0 0.0
  %1172 = vmatprep.mubr.f32.mxu0 0.0
  %1173 = vmatmul.mubr.f32.gmra.mxu0 %v1102
  %v1174 = vpop.f32.mrf.mxu0
  %v1175 = vadd.f32 %v1099, %v1174
  %v1176 = vpop.f32.mrf.mxu0
  %1177 = vdwg.mxu0
  %v1179 = vsel %vm1006, %v1175, 0
  %v1182 = vsel %vm1006, %v996, 0
  %v1185 = vsel %vm1006, %v997, 0
  %v1188 = vsel %vm1006, %v998, 0
  %1190 = vmatprep.subr.mxu0 0.0
  %1191 = vmatpush1.xpose.msra.mxu0 0.0
  %1192 = vmatprep.subr.mxu0 0.0
  %1193 = vmatpush1.xpose.msra.mxu0 0.0
  %1194 = vmatprep.subr.mxu0 0.0
  %1195 = vmatpush1.xpose.msra.mxu0 0.0
  %1196 = vmatprep.subr.mxu0 0.0
  %1197 = vmatpush1.xpose.msra.mxu0 0.0
  %1198 = vmatprep.subr.mxu0 0.0
  %1199 = vmatpush1.xpose.msra.mxu0 0.0
  %1200 = vmatprep.subr.mxu0 0.0
  %1201 = vmatpush1.xpose.msra.mxu0 0.0
  %1202 = vmatprep.subr.mxu0 0.0
  %1203 = vmatpush1.xpose.msra.mxu0 0.0
  %1204 = vmatprep.subr.mxu0 0.0
  %1205 = vmatpush1.xpose.msra.mxu0 0.0
  %1206 = vmatprep.subr.mxu0 0.0
  %1207 = vmatpush1.xpose.msra.mxu0 0.0
  %1208 = vmatprep.subr.mxu0 0.0
  %1209 = vmatpush1.xpose.msra.mxu0 0.0
  %1210 = vmatprep.subr.mxu0 0.0
  %1211 = vmatpush1.xpose.msra.mxu0 0.0
  %1212 = vmatprep.subr.mxu0 0.0
  %1213 = vmatpush1.xpose.msra.mxu0 0.0
  %1214 = vmatprep.subr.mxu0 0.0
  %1215 = vmatpush1.xpose.msra.mxu0 0.0
  %1216 = vmatprep.subr.mxu0 0.0
  %1217 = vmatpush1.xpose.msra.mxu0 %v1188
  %1218 = vmatprep.subr.mxu0 0.0
  %1219 = vmatpush1.xpose.msra.mxu0 %v1185
  %1220 = vmatprep.subr.mxu0 0.0
  %1221 = vmatpush1.xpose.msra.mxu0 %v1182
  %1222 = vmatprep.subr.mxu0 0.0
  %1223 = vmatpush2.xpose.msra.mxu0 0.0
  %1224 = vmatprep.subr.mxu0 0.0
  %1225 = vmatpush2.xpose.msra.mxu0 0.0
  %1226 = vmatprep.subr.mxu0 0.0
  %1227 = vmatpush2.xpose.msra.mxu0 0.0
  %1228 = vmatprep.subr.mxu0 0.0
  %1229 = vmatpush2.xpose.msra.mxu0 0.0
  %1230 = vmatprep.subr.mxu0 0.0
  %1231 = vmatpush2.xpose.msra.mxu0 0.0
  %1232 = vmatprep.subr.mxu0 0.0
  %1233 = vmatpush2.xpose.msra.mxu0 0.0
  %1234 = vmatprep.subr.mxu0 0.0
  %1235 = vmatpush2.xpose.msra.mxu0 0.0
  %1236 = vmatprep.subr.mxu0 0.0
  %1237 = vmatpush2.xpose.msra.mxu0 0.0
  %1238 = vmatprep.subr.mxu0 0.0
  %1239 = vmatpush2.xpose.msra.mxu0 0.0
  %1240 = vmatprep.subr.mxu0 0.0
  %1241 = vmatpush2.xpose.msra.mxu0 0.0
  %1242 = vmatprep.subr.mxu0 0.0
  %1243 = vmatpush2.xpose.msra.mxu0 0.0
  %1244 = vmatprep.subr.mxu0 0.0
  %1245 = vmatpush2.xpose.msra.mxu0 0.0
  %1246 = vmatprep.subr.mxu0 0.0
  %1247 = vmatpush2.xpose.msra.mxu0 0.0
  %1248 = vmatprep.subr.mxu0 0.0
  %1249 = vmatpush2.xpose.msra.mxu0 0.0
  %1250 = vmatprep.subr.mxu0 0.0
  %1251 = vmatpush2.xpose.msra.mxu0 0.0
  %1252 = vmatprep.subr.mxu0 0.0
  %1253 = vmatpush2.xpose.msra.mxu0 0.0
  %1254 = vmatprep.mubr.f32.mxu0 0.0
  %1255 = vmatmul.mubr.f32.gmra.mxu0 %v1179
  %v1256 = vpop.f32.mrf.mxu0
  %v1257 = vadd.f32 0.0, %v1256
  %v1258 = vpop.f32.mrf.mxu0
  %1259 = vdwg.mxu0
  %v1260 = vadd.f32 %v1004, %v1257
  %1261 = vrot.lane.b32.xlu0 %v237, 116
  %v1262 = vpop.permute.xlu0 %1261
  %1263 = vrot.lane.b32.xlu0 %v834, 116
  %v1264 = vpop.permute.xlu0 %1263
  %v1265 = vsel %vm1006, %v1262, 0
  %v1267 = vsel %vm1006, %v1264, 0
  %1269 = vmatprep.subr.mxu0 0.0
  %1270 = vmatpush1.xpose.msra.mxu0 0.0
  %1271 = vmatprep.subr.mxu0 0.0
  %1272 = vmatpush1.xpose.msra.mxu0 0.0
  %1273 = vmatprep.subr.mxu0 0.0
  %1274 = vmatpush1.xpose.msra.mxu0 0.0
  %1275 = vmatprep.subr.mxu0 0.0
  %1276 = vmatpush1.xpose.msra.mxu0 0.0
  %1277 = vmatprep.subr.mxu0 0.0
  %1278 = vmatpush1.xpose.msra.mxu0 0.0
  %1279 = vmatprep.subr.mxu0 0.0
  %1280 = vmatpush1.xpose.msra.mxu0 0.0
  %1281 = vmatprep.subr.mxu0 0.0
  %1282 = vmatpush1.xpose.msra.mxu0 0.0
  %1283 = vmatprep.subr.mxu0 0.0
  %1284 = vmatpush1.xpose.msra.mxu0 0.0
  %1285 = vmatprep.subr.mxu0 0.0
  %1286 = vmatpush1.xpose.msra.mxu0 0.0
  %1287 = vmatprep.subr.mxu0 0.0
  %1288 = vmatpush1.xpose.msra.mxu0 0.0
  %1289 = vmatprep.subr.mxu0 0.0
  %1290 = vmatpush1.xpose.msra.mxu0 0.0
  %1291 = vmatprep.subr.mxu0 0.0
  %1292 = vmatpush1.xpose.msra.mxu0 0.0
  %1293 = vmatprep.subr.mxu0 0.0
  %1294 = vmatpush1.xpose.msra.mxu0 0.0
  %1295 = vmatprep.subr.mxu0 0.0
  %1296 = vmatpush1.xpose.msra.mxu0 0.0
  %1297 = vmatprep.subr.mxu0 0.0
  %1298 = vmatpush1.xpose.msra.mxu0 0.0
  %1299 = vmatprep.subr.mxu0 0.0
  %1300 = vmatpush1.xpose.msra.mxu0 %v1267
  %1301 = vmatprep.subr.mxu0 0.0
  %1302 = vmatpush2.xpose.msra.mxu0 0.0
  %1303 = vmatprep.subr.mxu0 0.0
  %1304 = vmatpush2.xpose.msra.mxu0 0.0
  %1305 = vmatprep.subr.mxu0 0.0
  %1306 = vmatpush2.xpose.msra.mxu0 0.0
  %1307 = vmatprep.subr.mxu0 0.0
  %1308 = vmatpush2.xpose.msra.mxu0 0.0
  %1309 = vmatprep.subr.mxu0 0.0
  %1310 = vmatpush2.xpose.msra.mxu0 0.0
  %1311 = vmatprep.subr.mxu0 0.0
  %1312 = vmatpush2.xpose.msra.mxu0 0.0
  %1313 = vmatprep.subr.mxu0 0.0
  %1314 = vmatpush2.xpose.msra.mxu0 0.0
  %1315 = vmatprep.subr.mxu0 0.0
  %1316 = vmatpush2.xpose.msra.mxu0 0.0
  %1317 = vmatprep.subr.mxu0 0.0
  %1318 = vmatpush2.xpose.msra.mxu0 0.0
  %1319 = vmatprep.subr.mxu0 0.0
  %1320 = vmatpush2.xpose.msra.mxu0 0.0
  %1321 = vmatprep.subr.mxu0 0.0
  %1322 = vmatpush2.xpose.msra.mxu0 0.0
  %1323 = vmatprep.subr.mxu0 0.0
  %1324 = vmatpush2.xpose.msra.mxu0 0.0
  %1325 = vmatprep.subr.mxu0 0.0
  %1326 = vmatpush2.xpose.msra.mxu0 0.0
  %1327 = vmatprep.subr.mxu0 0.0
  %1328 = vmatpush2.xpose.msra.mxu0 0.0
  %1329 = vmatprep.subr.mxu0 0.0
  %1330 = vmatpush2.xpose.msra.mxu0 0.0
  %1331 = vmatprep.subr.mxu0 0.0
  %1332 = vmatpush2.xpose.msra.mxu0 0.0
  %1333 = vmatprep.mubr.f32.mxu0 0.0
  %1334 = vmatmul.mubr.f32.gmra.mxu0 %v1265
  %v1335 = vpop.f32.mrf.mxu0
  %v1336 = vadd.f32 0.0, %v1335
  %v1337 = vpop.f32.mrf.mxu0
  %1338 = vdwg.mxu0
  %1340 = vrot.lane.b32.xlu0 %v1089, 116
  %v1341 = vpop.permute.xlu0 %1340
  %v1343 = vsel %vm1006, %v1341, 0.0
  %1344 = vadd.xlane.f32.xlu0 %v1343
  %v1345 = vpop.xlane.xlu0 %1344
  %v1346 = vmul.f32 %v1345, %v1097
  %1347 = vrot.lane.b32.xlu0 %v992, 116
  %v1348 = vpop.permute.xlu0 %1347
  %1350 = vrot.lane.b32.xlu0 %v1346, 116
  %v1351 = vpop.permute.xlu0 %1350
  %v1354 = vsel %vm1100, %v1336, 0
  %v1356 = vsel %vm1104, %v1348, 0
  %1358 = vmatprep.subr.mxu0 0.0
  %1359 = vmatpush1.msra.mxu0 0.0
  %1360 = vmatprep.subr.mxu0 0.0
  %1361 = vmatpush1.msra.mxu0 0.0
  %1362 = vmatprep.subr.mxu0 0.0
  %1363 = vmatpush1.msra.mxu0 0.0
  %1364 = vmatprep.subr.mxu0 0.0
  %1365 = vmatpush1.msra.mxu0 0.0
  %1366 = vmatprep.subr.mxu0 0.0
  %1367 = vmatpush1.msra.mxu0 0.0
  %1368 = vmatprep.subr.mxu0 0.0
  %1369 = vmatpush1.msra.mxu0 0.0
  %1370 = vmatprep.subr.mxu0 0.0
  %1371 = vmatpush1.msra.mxu0 0.0
  %1372 = vmatprep.subr.mxu0 0.0
  %1373 = vmatpush1.msra.mxu0 0.0
  %1374 = vmatprep.subr.mxu0 0.0
  %1375 = vmatpush1.msra.mxu0 0.0
  %1376 = vmatprep.subr.mxu0 0.0
  %1377 = vmatpush1.msra.mxu0 0.0
  %1378 = vmatprep.subr.mxu0 0.0
  %1379 = vmatpush1.msra.mxu0 0.0
  %1380 = vmatprep.subr.mxu0 0.0
  %1381 = vmatpush1.msra.mxu0 0.0
  %1382 = vmatprep.subr.mxu0 0.0
  %1383 = vmatpush1.msra.mxu0 0.0
  %1384 = vmatprep.subr.mxu0 0.0
  %1385 = vmatpush1.msra.mxu0 0.0
  %1386 = vmatprep.subr.mxu0 0.0
  %1387 = vmatpush1.msra.mxu0 0.0
  %1388 = vmatprep.subr.mxu0 0.0
  %1389 = vmatpush1.msra.mxu0 %v1356
  %1390 = vmatprep.subr.mxu0 0.0
  %1391 = vmatpush2.msra.mxu0 0.0
  %1392 = vmatprep.subr.mxu0 0.0
  %1393 = vmatpush2.msra.mxu0 0.0
  %1394 = vmatprep.subr.mxu0 0.0
  %1395 = vmatpush2.msra.mxu0 0.0
  %1396 = vmatprep.subr.mxu0 0.0
  %1397 = vmatpush2.msra.mxu0 0.0
  %1398 = vmatprep.subr.mxu0 0.0
  %1399 = vmatpush2.msra.mxu0 0.0
  %1400 = vmatprep.subr.mxu0 0.0
  %1401 = vmatpush2.msra.mxu0 0.0
  %1402 = vmatprep.subr.mxu0 0.0
  %1403 = vmatpush2.msra.mxu0 0.0
  %1404 = vmatprep.subr.mxu0 0.0
  %1405 = vmatpush2.msra.mxu0 0.0
  %1406 = vmatprep.subr.mxu0 0.0
  %1407 = vmatpush2.msra.mxu0 0.0
  %1408 = vmatprep.subr.mxu0 0.0
  %1409 = vmatpush2.msra.mxu0 0.0
  %1410 = vmatprep.subr.mxu0 0.0
  %1411 = vmatpush2.msra.mxu0 0.0
  %1412 = vmatprep.subr.mxu0 0.0
  %1413 = vmatpush2.msra.mxu0 0.0
  %1414 = vmatprep.subr.mxu0 0.0
  %1415 = vmatpush2.msra.mxu0 0.0
  %1416 = vmatprep.subr.mxu0 0.0
  %1417 = vmatpush2.msra.mxu0 0.0
  %1418 = vmatprep.subr.mxu0 0.0
  %1419 = vmatpush2.msra.mxu0 0.0
  %1420 = vmatprep.subr.mxu0 0.0
  %1421 = vmatpush2.msra.mxu0 0.0
  %1422 = vmatprep.mubr.f32.mxu0 0.0
  %1423 = vmatmul.mubr.f32.gmra.mxu0 %v1354
  %v1424 = vpop.f32.mrf.mxu0
  %v1425 = vadd.f32 %v1351, %v1424
  %v1426 = vpop.f32.mrf.mxu0
  %1427 = vdwg.mxu0
  %1428 = vrot.lane.b32.xlu0 %v996, 116
  %v1429 = vpop.permute.xlu0 %1428
  %1430 = vrot.lane.b32.xlu0 %v997, 116
  %v1431 = vpop.permute.xlu0 %1430
  %1432 = vrot.lane.b32.xlu0 %v998, 116
  %v1433 = vpop.permute.xlu0 %1432
  %v1435 = vsel %vm1006, %v1425, 0
  %v1437 = vsel %vm1006, %v1429, 0
  %v1439 = vsel %vm1006, %v1431, 0
  %v1441 = vsel %vm1006, %v1433, 0
  %1443 = vmatprep.subr.mxu0 0.0
  %1444 = vmatpush1.xpose.msra.mxu0 0.0
  %1445 = vmatprep.subr.mxu0 0.0
  %1446 = vmatpush1.xpose.msra.mxu0 0.0
  %1447 = vmatprep.subr.mxu0 0.0
  %1448 = vmatpush1.xpose.msra.mxu0 0.0
  %1449 = vmatprep.subr.mxu0 0.0
  %1450 = vmatpush1.xpose.msra.mxu0 0.0
  %1451 = vmatprep.subr.mxu0 0.0
  %1452 = vmatpush1.xpose.msra.mxu0 0.0
  %1453 = vmatprep.subr.mxu0 0.0
  %1454 = vmatpush1.xpose.msra.mxu0 0.0
  %1455 = vmatprep.subr.mxu0 0.0
  %1456 = vmatpush1.xpose.msra.mxu0 0.0
  %1457 = vmatprep.subr.mxu0 0.0
  %1458 = vmatpush1.xpose.msra.mxu0 0.0
  %1459 = vmatprep.subr.mxu0 0.0
  %1460 = vmatpush1.xpose.msra.mxu0 0.0
  %1461 = vmatprep.subr.mxu0 0.0
  %1462 = vmatpush1.xpose.msra.mxu0 0.0
  %1463 = vmatprep.subr.mxu0 0.0
  %1464 = vmatpush1.xpose.msra.mxu0 0.0
  %1465 = vmatprep.subr.mxu0 0.0
  %1466 = vmatpush1.xpose.msra.mxu0 0.0
  %1467 = vmatprep.subr.mxu0 0.0
  %1468 = vmatpush1.xpose.msra.mxu0 0.0
  %1469 = vmatprep.subr.mxu0 0.0
  %1470 = vmatpush1.xpose.msra.mxu0 %v1441
  %1471 = vmatprep.subr.mxu0 0.0
  %1472 = vmatpush1.xpose.msra.mxu0 %v1439
  %1473 = vmatprep.subr.mxu0 0.0
  %1474 = vmatpush1.xpose.msra.mxu0 %v1437
  %1475 = vmatprep.subr.mxu0 0.0
  %1476 = vmatpush2.xpose.msra.mxu0 0.0
  %1477 = vmatprep.subr.mxu0 0.0
  %1478 = vmatpush2.xpose.msra.mxu0 0.0
  %1479 = vmatprep.subr.mxu0 0.0
  %1480 = vmatpush2.xpose.msra.mxu0 0.0
  %1481 = vmatprep.subr.mxu0 0.0
  %1482 = vmatpush2.xpose.msra.mxu0 0.0
  %1483 = vmatprep.subr.mxu0 0.0
  %1484 = vmatpush2.xpose.msra.mxu0 0.0
  %1485 = vmatprep.subr.mxu0 0.0
  %1486 = vmatpush2.xpose.msra.mxu0 0.0
  %1487 = vmatprep.subr.mxu0 0.0
  %1488 = vmatpush2.xpose.msra.mxu0 0.0
  %1489 = vmatprep.subr.mxu0 0.0
  %1490 = vmatpush2.xpose.msra.mxu0 0.0
  %1491 = vmatprep.subr.mxu0 0.0
  %1492 = vmatpush2.xpose.msra.mxu0 0.0
  %1493 = vmatprep.subr.mxu0 0.0
  %1494 = vmatpush2.xpose.msra.mxu0 0.0
  %1495 = vmatprep.subr.mxu0 0.0
  %1496 = vmatpush2.xpose.msra.mxu0 0.0
  %1497 = vmatprep.subr.mxu0 0.0
  %1498 = vmatpush2.xpose.msra.mxu0 0.0
  %1499 = vmatprep.subr.mxu0 0.0
  %1500 = vmatpush2.xpose.msra.mxu0 0.0
  %1501 = vmatprep.subr.mxu0 0.0
  %1502 = vmatpush2.xpose.msra.mxu0 0.0
  %1503 = vmatprep.subr.mxu0 0.0
  %1504 = vmatpush2.xpose.msra.mxu0 0.0
  %1505 = vmatprep.subr.mxu0 0.0
  %1506 = vmatpush2.xpose.msra.mxu0 0.0
  %1507 = vmatprep.mubr.f32.mxu0 0.0
  %1508 = vmatmul.mubr.f32.gmra.mxu0 %v1435
  %v1509 = vpop.f32.mrf.mxu0
  %v1510 = vadd.f32 0.0, %v1509
  %v1511 = vpop.f32.mrf.mxu0
  %1512 = vdwg.mxu0
  %v1513 = vadd.f32 %v1260, %v1510
  %1514 = vst.msk [vmem:[%s13] sm:$0xff] %vm53, %v1513
  %v1516 = vsel %vm1006, %v238, 0
  %v1519 = vsel %vm1006, %v835, 0
  %1521 = vmatprep.subr.mxu0 0.0
  %1522 = vmatpush1.xpose.msra.mxu0 0.0
  %1523 = vmatprep.subr.mxu0 0.0
  %1524 = vmatpush1.xpose.msra.mxu0 0.0
  %1525 = vmatprep.subr.mxu0 0.0
  %1526 = vmatpush1.xpose.msra.mxu0 0.0
  %1527 = vmatprep.subr.mxu0 0.0
  %1528 = vmatpush1.xpose.msra.mxu0 0.0
  %1529 = vmatprep.subr.mxu0 0.0
  %1530 = vmatpush1.xpose.msra.mxu0 0.0
  %1531 = vmatprep.subr.mxu0 0.0
  %1532 = vmatpush1.xpose.msra.mxu0 0.0
  %1533 = vmatprep.subr.mxu0 0.0
  %1534 = vmatpush1.xpose.msra.mxu0 0.0
  %1535 = vmatprep.subr.mxu0 0.0
  %1536 = vmatpush1.xpose.msra.mxu0 0.0
  %1537 = vmatprep.subr.mxu0 0.0
  %1538 = vmatpush1.xpose.msra.mxu0 0.0
  %1539 = vmatprep.subr.mxu0 0.0
  %1540 = vmatpush1.xpose.msra.mxu0 0.0
  %1541 = vmatprep.subr.mxu0 0.0
  %1542 = vmatpush1.xpose.msra.mxu0 0.0
  %1543 = vmatprep.subr.mxu0 0.0
  %1544 = vmatpush1.xpose.msra.mxu0 0.0
  %1545 = vmatprep.subr.mxu0 0.0
  %1546 = vmatpush1.xpose.msra.mxu0 0.0
  %1547 = vmatprep.subr.mxu0 0.0
  %1548 = vmatpush1.xpose.msra.mxu0 0.0
  %1549 = vmatprep.subr.mxu0 0.0
  %1550 = vmatpush1.xpose.msra.mxu0 0.0
  %1551 = vmatprep.subr.mxu0 0.0
  %1552 = vmatpush1.xpose.msra.mxu0 %v1519
  %1553 = vmatprep.subr.mxu0 0.0
  %1554 = vmatpush2.xpose.msra.mxu0 0.0
  %1555 = vmatprep.subr.mxu0 0.0
  %1556 = vmatpush2.xpose.msra.mxu0 0.0
  %1557 = vmatprep.subr.mxu0 0.0
  %1558 = vmatpush2.xpose.msra.mxu0 0.0
  %1559 = vmatprep.subr.mxu0 0.0
  %1560 = vmatpush2.xpose.msra.mxu0 0.0
  %1561 = vmatprep.subr.mxu0 0.0
  %1562 = vmatpush2.xpose.msra.mxu0 0.0
  %1563 = vmatprep.subr.mxu0 0.0
  %1564 = vmatpush2.xpose.msra.mxu0 0.0
  %1565 = vmatprep.subr.mxu0 0.0
  %1566 = vmatpush2.xpose.msra.mxu0 0.0
  %1567 = vmatprep.subr.mxu0 0.0
  %1568 = vmatpush2.xpose.msra.mxu0 0.0
  %1569 = vmatprep.subr.mxu0 0.0
  %1570 = vmatpush2.xpose.msra.mxu0 0.0
  %1571 = vmatprep.subr.mxu0 0.0
  %1572 = vmatpush2.xpose.msra.mxu0 0.0
  %1573 = vmatprep.subr.mxu0 0.0
  %1574 = vmatpush2.xpose.msra.mxu0 0.0
  %1575 = vmatprep.subr.mxu0 0.0
  %1576 = vmatpush2.xpose.msra.mxu0 0.0
  %1577 = vmatprep.subr.mxu0 0.0
  %1578 = vmatpush2.xpose.msra.mxu0 0.0
  %1579 = vmatprep.subr.mxu0 0.0
  %1580 = vmatpush2.xpose.msra.mxu0 0.0
  %1581 = vmatprep.subr.mxu0 0.0
  %1582 = vmatpush2.xpose.msra.mxu0 0.0
  %1583 = vmatprep.subr.mxu0 0.0
  %1584 = vmatpush2.xpose.msra.mxu0 0.0
  %1585 = vmatprep.mubr.f32.mxu0 0.0
  %1586 = vmatmul.mubr.f32.gmra.mxu0 %v1516
  %v1587 = vpop.f32.mrf.mxu0
  %v1588 = vadd.f32 0.0, %v1587
  %v1589 = vpop.f32.mrf.mxu0
  %1590 = vdwg.mxu0
  %v1591 = vmul.f32 %v238, %v1087
  %v1592 = vsel %vm1006, %v1591, 0.0
  %1593 = vadd.xlane.f32.xlu0 %v1592
  %v1594 = vpop.xlane.xlu0 %1593
  %v1595 = vmul.f32 %v1594, %v1097
  %v1597 = vsel %vm1100, %v1588, 0
  %v1600 = vsel %vm1104, %v993, 0
  %1602 = vmatprep.subr.mxu0 0.0
  %1603 = vmatpush1.msra.mxu0 0.0
  %1604 = vmatprep.subr.mxu0 0.0
  %1605 = vmatpush1.msra.mxu0 0.0
  %1606 = vmatprep.subr.mxu0 0.0
  %1607 = vmatpush1.msra.mxu0 0.0
  %1608 = vmatprep.subr.mxu0 0.0
  %1609 = vmatpush1.msra.mxu0 0.0
  %1610 = vmatprep.subr.mxu0 0.0
  %1611 = vmatpush1.msra.mxu0 0.0
  %1612 = vmatprep.subr.mxu0 0.0
  %1613 = vmatpush1.msra.mxu0 0.0
  %1614 = vmatprep.subr.mxu0 0.0
  %1615 = vmatpush1.msra.mxu0 0.0
  %1616 = vmatprep.subr.mxu0 0.0
  %1617 = vmatpush1.msra.mxu0 0.0
  %1618 = vmatprep.subr.mxu0 0.0
  %1619 = vmatpush1.msra.mxu0 0.0
  %1620 = vmatprep.subr.mxu0 0.0
  %1621 = vmatpush1.msra.mxu0 0.0
  %1622 = vmatprep.subr.mxu0 0.0
  %1623 = vmatpush1.msra.mxu0 0.0
  %1624 = vmatprep.subr.mxu0 0.0
  %1625 = vmatpush1.msra.mxu0 0.0
  %1626 = vmatprep.subr.mxu0 0.0
  %1627 = vmatpush1.msra.mxu0 0.0
  %1628 = vmatprep.subr.mxu0 0.0
  %1629 = vmatpush1.msra.mxu0 0.0
  %1630 = vmatprep.subr.mxu0 0.0
  %1631 = vmatpush1.msra.mxu0 0.0
  %1632 = vmatprep.subr.mxu0 0.0
  %1633 = vmatpush1.msra.mxu0 %v1600
  %1634 = vmatprep.subr.mxu0 0.0
  %1635 = vmatpush2.msra.mxu0 0.0
  %1636 = vmatprep.subr.mxu0 0.0
  %1637 = vmatpush2.msra.mxu0 0.0
  %1638 = vmatprep.subr.mxu0 0.0
  %1639 = vmatpush2.msra.mxu0 0.0
  %1640 = vmatprep.subr.mxu0 0.0
  %1641 = vmatpush2.msra.mxu0 0.0
  %1642 = vmatprep.subr.mxu0 0.0
  %1643 = vmatpush2.msra.mxu0 0.0
  %1644 = vmatprep.subr.mxu0 0.0
  %1645 = vmatpush2.msra.mxu0 0.0
  %1646 = vmatprep.subr.mxu0 0.0
  %1647 = vmatpush2.msra.mxu0 0.0
  %1648 = vmatprep.subr.mxu0 0.0
  %1649 = vmatpush2.msra.mxu0 0.0
  %1650 = vmatprep.subr.mxu0 0.0
  %1651 = vmatpush2.msra.mxu0 0.0
  %1652 = vmatprep.subr.mxu0 0.0
  %1653 = vmatpush2.msra.mxu0 0.0
  %1654 = vmatprep.subr.mxu0 0.0
  %1655 = vmatpush2.msra.mxu0 0.0
  %1656 = vmatprep.subr.mxu0 0.0
  %1657 = vmatpush2.msra.mxu0 0.0
  %1658 = vmatprep.subr.mxu0 0.0
  %1659 = vmatpush2.msra.mxu0 0.0
  %1660 = vmatprep.subr.mxu0 0.0
  %1661 = vmatpush2.msra.mxu0 0.0
  %1662 = vmatprep.subr.mxu0 0.0
  %1663 = vmatpush2.msra.mxu0 0.0
  %1664 = vmatprep.subr.mxu0 0.0
  %1665 = vmatpush2.msra.mxu0 0.0
  %1666 = vmatprep.mubr.f32.mxu0 0.0
  %1667 = vmatmul.mubr.f32.gmra.mxu0 %v1597
  %v1668 = vpop.f32.mrf.mxu0
  %v1669 = vadd.f32 %v1595, %v1668
  %v1670 = vpop.f32.mrf.mxu0
  %1671 = vdwg.mxu0
  %v1673 = vsel %vm1006, %v1669, 0
  %1675 = vmatprep.subr.mxu0 0.0
  %1676 = vmatpush1.xpose.msra.mxu0 0.0
  %1677 = vmatprep.subr.mxu0 0.0
  %1678 = vmatpush1.xpose.msra.mxu0 0.0
  %1679 = vmatprep.subr.mxu0 0.0
  %1680 = vmatpush1.xpose.msra.mxu0 0.0
  %1681 = vmatprep.subr.mxu0 0.0
  %1682 = vmatpush1.xpose.msra.mxu0 0.0
  %1683 = vmatprep.subr.mxu0 0.0
  %1684 = vmatpush1.xpose.msra.mxu0 0.0
  %1685 = vmatprep.subr.mxu0 0.0
  %1686 = vmatpush1.xpose.msra.mxu0 0.0
  %1687 = vmatprep.subr.mxu0 0.0
  %1688 = vmatpush1.xpose.msra.mxu0 0.0
  %1689 = vmatprep.subr.mxu0 0.0
  %1690 = vmatpush1.xpose.msra.mxu0 0.0
  %1691 = vmatprep.subr.mxu0 0.0
  %1692 = vmatpush1.xpose.msra.mxu0 0.0
  %1693 = vmatprep.subr.mxu0 0.0
  %1694 = vmatpush1.xpose.msra.mxu0 0.0
  %1695 = vmatprep.subr.mxu0 0.0
  %1696 = vmatpush1.xpose.msra.mxu0 0.0
  %1697 = vmatprep.subr.mxu0 0.0
  %1698 = vmatpush1.xpose.msra.mxu0 0.0
  %1699 = vmatprep.subr.mxu0 0.0
  %1700 = vmatpush1.xpose.msra.mxu0 0.0
  %1701 = vmatprep.subr.mxu0 0.0
  %1702 = vmatpush1.xpose.msra.mxu0 %v1188
  %1703 = vmatprep.subr.mxu0 0.0
  %1704 = vmatpush1.xpose.msra.mxu0 %v1185
  %1705 = vmatprep.subr.mxu0 0.0
  %1706 = vmatpush1.xpose.msra.mxu0 %v1182
  %1707 = vmatprep.subr.mxu0 0.0
  %1708 = vmatpush2.xpose.msra.mxu0 0.0
  %1709 = vmatprep.subr.mxu0 0.0
  %1710 = vmatpush2.xpose.msra.mxu0 0.0
  %1711 = vmatprep.subr.mxu0 0.0
  %1712 = vmatpush2.xpose.msra.mxu0 0.0
  %1713 = vmatprep.subr.mxu0 0.0
  %1714 = vmatpush2.xpose.msra.mxu0 0.0
  %1715 = vmatprep.subr.mxu0 0.0
  %1716 = vmatpush2.xpose.msra.mxu0 0.0
  %1717 = vmatprep.subr.mxu0 0.0
  %1718 = vmatpush2.xpose.msra.mxu0 0.0
  %1719 = vmatprep.subr.mxu0 0.0
  %1720 = vmatpush2.xpose.msra.mxu0 0.0
  %1721 = vmatprep.subr.mxu0 0.0
  %1722 = vmatpush2.xpose.msra.mxu0 0.0
  %1723 = vmatprep.subr.mxu0 0.0
  %1724 = vmatpush2.xpose.msra.mxu0 0.0
  %1725 = vmatprep.subr.mxu0 0.0
  %1726 = vmatpush2.xpose.msra.mxu0 0.0
  %1727 = vmatprep.subr.mxu0 0.0
  %1728 = vmatpush2.xpose.msra.mxu0 0.0
  %1729 = vmatprep.subr.mxu0 0.0
  %1730 = vmatpush2.xpose.msra.mxu0 0.0
  %1731 = vmatprep.subr.mxu0 0.0
  %1732 = vmatpush2.xpose.msra.mxu0 0.0
  %1733 = vmatprep.subr.mxu0 0.0
  %1734 = vmatpush2.xpose.msra.mxu0 0.0
  %1735 = vmatprep.subr.mxu0 0.0
  %1736 = vmatpush2.xpose.msra.mxu0 0.0
  %1737 = vmatprep.subr.mxu0 0.0
  %1738 = vmatpush2.xpose.msra.mxu0 0.0
  %1739 = vmatprep.mubr.f32.mxu0 0.0
  %1740 = vmatmul.mubr.f32.gmra.mxu0 %v1673
  %v1741 = vpop.f32.mrf.mxu0
  %v1742 = vadd.f32 0.0, %v1741
  %v1743 = vpop.f32.mrf.mxu0
  %1744 = vdwg.mxu0
  %v1745 = vadd.f32 %v1004, %v1742
  %1746 = vrot.lane.b32.xlu0 %v238, 116
  %v1747 = vpop.permute.xlu0 %1746
  %1748 = vrot.lane.b32.xlu0 %v835, 116
  %v1749 = vpop.permute.xlu0 %1748
  %v1750 = vsel %vm1006, %v1747, 0
  %v1752 = vsel %vm1006, %v1749, 0
  %1754 = vmatprep.subr.mxu0 0.0
  %1755 = vmatpush1.xpose.msra.mxu0 0.0
  %1756 = vmatprep.subr.mxu0 0.0
  %1757 = vmatpush1.xpose.msra.mxu0 0.0
  %1758 = vmatprep.subr.mxu0 0.0
  %1759 = vmatpush1.xpose.msra.mxu0 0.0
  %1760 = vmatprep.subr.mxu0 0.0
  %1761 = vmatpush1.xpose.msra.mxu0 0.0
  %1762 = vmatprep.subr.mxu0 0.0
  %1763 = vmatpush1.xpose.msra.mxu0 0.0
  %1764 = vmatprep.subr.mxu0 0.0
  %1765 = vmatpush1.xpose.msra.mxu0 0.0
  %1766 = vmatprep.subr.mxu0 0.0
  %1767 = vmatpush1.xpose.msra.mxu0 0.0
  %1768 = vmatprep.subr.mxu0 0.0
  %1769 = vmatpush1.xpose.msra.mxu0 0.0
  %1770 = vmatprep.subr.mxu0 0.0
  %1771 = vmatpush1.xpose.msra.mxu0 0.0
  %1772 = vmatprep.subr.mxu0 0.0
  %1773 = vmatpush1.xpose.msra.mxu0 0.0
  %1774 = vmatprep.subr.mxu0 0.0
  %1775 = vmatpush1.xpose.msra.mxu0 0.0
  %1776 = vmatprep.subr.mxu0 0.0
  %1777 = vmatpush1.xpose.msra.mxu0 0.0
  %1778 = vmatprep.subr.mxu0 0.0
  %1779 = vmatpush1.xpose.msra.mxu0 0.0
  %1780 = vmatprep.subr.mxu0 0.0
  %1781 = vmatpush1.xpose.msra.mxu0 0.0
  %1782 = vmatprep.subr.mxu0 0.0
  %1783 = vmatpush1.xpose.msra.mxu0 0.0
  %1784 = vmatprep.subr.mxu0 0.0
  %1785 = vmatpush1.xpose.msra.mxu0 %v1752
  %1786 = vmatprep.subr.mxu0 0.0
  %1787 = vmatpush2.xpose.msra.mxu0 0.0
  %1788 = vmatprep.subr.mxu0 0.0
  %1789 = vmatpush2.xpose.msra.mxu0 0.0
  %1790 = vmatprep.subr.mxu0 0.0
  %1791 = vmatpush2.xpose.msra.mxu0 0.0
  %1792 = vmatprep.subr.mxu0 0.0
  %1793 = vmatpush2.xpose.msra.mxu0 0.0
  %1794 = vmatprep.subr.mxu0 0.0
  %1795 = vmatpush2.xpose.msra.mxu0 0.0
  %1796 = vmatprep.subr.mxu0 0.0
  %1797 = vmatpush2.xpose.msra.mxu0 0.0
  %1798 = vmatprep.subr.mxu0 0.0
  %1799 = vmatpush2.xpose.msra.mxu0 0.0
  %1800 = vmatprep.subr.mxu0 0.0
  %1801 = vmatpush2.xpose.msra.mxu0 0.0
  %1802 = vmatprep.subr.mxu0 0.0
  %1803 = vmatpush2.xpose.msra.mxu0 0.0
  %1804 = vmatprep.subr.mxu0 0.0
  %1805 = vmatpush2.xpose.msra.mxu0 0.0
  %1806 = vmatprep.subr.mxu0 0.0
  %1807 = vmatpush2.xpose.msra.mxu0 0.0
  %1808 = vmatprep.subr.mxu0 0.0
  %1809 = vmatpush2.xpose.msra.mxu0 0.0
  %1810 = vmatprep.subr.mxu0 0.0
  %1811 = vmatpush2.xpose.msra.mxu0 0.0
  %1812 = vmatprep.subr.mxu0 0.0
  %1813 = vmatpush2.xpose.msra.mxu0 0.0
  %1814 = vmatprep.subr.mxu0 0.0
  %1815 = vmatpush2.xpose.msra.mxu0 0.0
  %1816 = vmatprep.subr.mxu0 0.0
  %1817 = vmatpush2.xpose.msra.mxu0 0.0
  %1818 = vmatprep.mubr.f32.mxu0 0.0
  %1819 = vmatmul.mubr.f32.gmra.mxu0 %v1750
  %v1820 = vpop.f32.mrf.mxu0
  %v1821 = vadd.f32 0.0, %v1820
  %v1822 = vpop.f32.mrf.mxu0
  %1823 = vdwg.mxu0
  %1825 = vrot.lane.b32.xlu0 %v1591, 116
  %v1826 = vpop.permute.xlu0 %1825
  %v1828 = vsel %vm1006, %v1826, 0.0
  %1829 = vadd.xlane.f32.xlu0 %v1828
  %v1830 = vpop.xlane.xlu0 %1829
  %v1831 = vmul.f32 %v1830, %v1097
  %1832 = vrot.lane.b32.xlu0 %v993, 116
  %v1833 = vpop.permute.xlu0 %1832
  %1835 = vrot.lane.b32.xlu0 %v1831, 116
  %v1836 = vpop.permute.xlu0 %1835
  %v1839 = vsel %vm1100, %v1821, 0
  %v1841 = vsel %vm1104, %v1833, 0
  %1843 = vmatprep.subr.mxu0 0.0
  %1844 = vmatpush1.msra.mxu0 0.0
  %1845 = vmatprep.subr.mxu0 0.0
  %1846 = vmatpush1.msra.mxu0 0.0
  %1847 = vmatprep.subr.mxu0 0.0
  %1848 = vmatpush1.msra.mxu0 0.0
  %1849 = vmatprep.subr.mxu0 0.0
  %1850 = vmatpush1.msra.mxu0 0.0
  %1851 = vmatprep.subr.mxu0 0.0
  %1852 = vmatpush1.msra.mxu0 0.0
  %1853 = vmatprep.subr.mxu0 0.0
  %1854 = vmatpush1.msra.mxu0 0.0
  %1855 = vmatprep.subr.mxu0 0.0
  %1856 = vmatpush1.msra.mxu0 0.0
  %1857 = vmatprep.subr.mxu0 0.0
  %1858 = vmatpush1.msra.mxu0 0.0
  %1859 = vmatprep.subr.mxu0 0.0
  %1860 = vmatpush1.msra.mxu0 0.0
  %1861 = vmatprep.subr.mxu0 0.0
  %1862 = vmatpush1.msra.mxu0 0.0
  %1863 = vmatprep.subr.mxu0 0.0
  %1864 = vmatpush1.msra.mxu0 0.0
  %1865 = vmatprep.subr.mxu0 0.0
  %1866 = vmatpush1.msra.mxu0 0.0
  %1867 = vmatprep.subr.mxu0 0.0
  %1868 = vmatpush1.msra.mxu0 0.0
  %1869 = vmatprep.subr.mxu0 0.0
  %1870 = vmatpush1.msra.mxu0 0.0
  %1871 = vmatprep.subr.mxu0 0.0
  %1872 = vmatpush1.msra.mxu0 0.0
  %1873 = vmatprep.subr.mxu0 0.0
  %1874 = vmatpush1.msra.mxu0 %v1841
  %1875 = vmatprep.subr.mxu0 0.0
  %1876 = vmatpush2.msra.mxu0 0.0
  %1877 = vmatprep.subr.mxu0 0.0
  %1878 = vmatpush2.msra.mxu0 0.0
  %1879 = vmatprep.subr.mxu0 0.0
  %1880 = vmatpush2.msra.mxu0 0.0
  %1881 = vmatprep.subr.mxu0 0.0
  %1882 = vmatpush2.msra.mxu0 0.0
  %1883 = vmatprep.subr.mxu0 0.0
  %1884 = vmatpush2.msra.mxu0 0.0
  %1885 = vmatprep.subr.mxu0 0.0
  %1886 = vmatpush2.msra.mxu0 0.0
  %1887 = vmatprep.subr.mxu0 0.0
  %1888 = vmatpush2.msra.mxu0 0.0
  %1889 = vmatprep.subr.mxu0 0.0
  %1890 = vmatpush2.msra.mxu0 0.0
  %1891 = vmatprep.subr.mxu0 0.0
  %1892 = vmatpush2.msra.mxu0 0.0
  %1893 = vmatprep.subr.mxu0 0.0
  %1894 = vmatpush2.msra.mxu0 0.0
  %1895 = vmatprep.subr.mxu0 0.0
  %1896 = vmatpush2.msra.mxu0 0.0
  %1897 = vmatprep.subr.mxu0 0.0
  %1898 = vmatpush2.msra.mxu0 0.0
  %1899 = vmatprep.subr.mxu0 0.0
  %1900 = vmatpush2.msra.mxu0 0.0
  %1901 = vmatprep.subr.mxu0 0.0
  %1902 = vmatpush2.msra.mxu0 0.0
  %1903 = vmatprep.subr.mxu0 0.0
  %1904 = vmatpush2.msra.mxu0 0.0
  %1905 = vmatprep.subr.mxu0 0.0
  %1906 = vmatpush2.msra.mxu0 0.0
  %1907 = vmatprep.mubr.f32.mxu0 0.0
  %1908 = vmatmul.mubr.f32.gmra.mxu0 %v1839
  %v1909 = vpop.f32.mrf.mxu0
  %v1910 = vadd.f32 %v1836, %v1909
  %v1911 = vpop.f32.mrf.mxu0
  %1912 = vdwg.mxu0
  %v1914 = vsel %vm1006, %v1910, 0
  %1916 = vmatprep.subr.mxu0 0.0
  %1917 = vmatpush1.xpose.msra.mxu0 0.0
  %1918 = vmatprep.subr.mxu0 0.0
  %1919 = vmatpush1.xpose.msra.mxu0 0.0
  %1920 = vmatprep.subr.mxu0 0.0
  %1921 = vmatpush1.xpose.msra.mxu0 0.0
  %1922 = vmatprep.subr.mxu0 0.0
  %1923 = vmatpush1.xpose.msra.mxu0 0.0
  %1924 = vmatprep.subr.mxu0 0.0
  %1925 = vmatpush1.xpose.msra.mxu0 0.0
  %1926 = vmatprep.subr.mxu0 0.0
  %1927 = vmatpush1.xpose.msra.mxu0 0.0
  %1928 = vmatprep.subr.mxu0 0.0
  %1929 = vmatpush1.xpose.msra.mxu0 0.0
  %1930 = vmatprep.subr.mxu0 0.0
  %1931 = vmatpush1.xpose.msra.mxu0 0.0
  %1932 = vmatprep.subr.mxu0 0.0
  %1933 = vmatpush1.xpose.msra.mxu0 0.0
  %1934 = vmatprep.subr.mxu0 0.0
  %1935 = vmatpush1.xpose.msra.mxu0 0.0
  %1936 = vmatprep.subr.mxu0 0.0
  %1937 = vmatpush1.xpose.msra.mxu0 0.0
  %1938 = vmatprep.subr.mxu0 0.0
  %1939 = vmatpush1.xpose.msra.mxu0 0.0
  %1940 = vmatprep.subr.mxu0 0.0
  %1941 = vmatpush1.xpose.msra.mxu0 0.0
  %1942 = vmatprep.subr.mxu0 0.0
  %1943 = vmatpush1.xpose.msra.mxu0 %v1441
  %1944 = vmatprep.subr.mxu0 0.0
  %1945 = vmatpush1.xpose.msra.mxu0 %v1439
  %1946 = vmatprep.subr.mxu0 0.0
  %1947 = vmatpush1.xpose.msra.mxu0 %v1437
  %1948 = vmatprep.subr.mxu0 0.0
  %1949 = vmatpush2.xpose.msra.mxu0 0.0
  %1950 = vmatprep.subr.mxu0 0.0
  %1951 = vmatpush2.xpose.msra.mxu0 0.0
  %1952 = vmatprep.subr.mxu0 0.0
  %1953 = vmatpush2.xpose.msra.mxu0 0.0
  %1954 = vmatprep.subr.mxu0 0.0
  %1955 = vmatpush2.xpose.msra.mxu0 0.0
  %1956 = vmatprep.subr.mxu0 0.0
  %1957 = vmatpush2.xpose.msra.mxu0 0.0
  %1958 = vmatprep.subr.mxu0 0.0
  %1959 = vmatpush2.xpose.msra.mxu0 0.0
  %1960 = vmatprep.subr.mxu0 0.0
  %1961 = vmatpush2.xpose.msra.mxu0 0.0
  %1962 = vmatprep.subr.mxu0 0.0
  %1963 = vmatpush2.xpose.msra.mxu0 0.0
  %1964 = vmatprep.subr.mxu0 0.0
  %1965 = vmatpush2.xpose.msra.mxu0 0.0
  %1966 = vmatprep.subr.mxu0 0.0
  %1967 = vmatpush2.xpose.msra.mxu0 0.0
  %1968 = vmatprep.subr.mxu0 0.0
  %1969 = vmatpush2.xpose.msra.mxu0 0.0
  %1970 = vmatprep.subr.mxu0 0.0
  %1971 = vmatpush2.xpose.msra.mxu0 0.0
  %1972 = vmatprep.subr.mxu0 0.0
  %1973 = vmatpush2.xpose.msra.mxu0 0.0
  %1974 = vmatprep.subr.mxu0 0.0
  %1975 = vmatpush2.xpose.msra.mxu0 0.0
  %1976 = vmatprep.subr.mxu0 0.0
  %1977 = vmatpush2.xpose.msra.mxu0 0.0
  %1978 = vmatprep.subr.mxu0 0.0
  %1979 = vmatpush2.xpose.msra.mxu0 0.0
  %1980 = vmatprep.mubr.f32.mxu0 0.0
  %1981 = vmatmul.mubr.f32.gmra.mxu0 %v1914
  %v1982 = vpop.f32.mrf.mxu0
  %v1983 = vadd.f32 0.0, %v1982
  %v1984 = vpop.f32.mrf.mxu0
  %1985 = vdwg.mxu0
  %v1986 = vadd.f32 %v1745, %v1983
  %1987 = vst.msk [vmem:[%s13 + $0x8] sm:$0xff] %vm53, %v1986
  // Predicated region
  $region54: #{customized_attn_forward.1} parent=0 // pred_check
    _
  $region55: #{customized_attn_forward.1} parent=0 // pred_check_branch
    %1989 = sbr.rel (0) target = $region57
  $region56: #{customized_attn_forward.1} parent=0 // pred_region
    _
  $region57: #{customized_attn_forward.1} parent=0 // pred_fallthru
    _
  // Predicated region
  $region58: #{customized_attn_forward.1} parent=0 // pred_check
    _
  $region59: #{customized_attn_forward.1} parent=0 // pred_check_branch
    %1991 = sbr.rel (0) target = $region61
  $region60: #{customized_attn_forward.1} parent=0 // pred_region
    _
  $region61: #{customized_attn_forward.1} parent=0 // pred_fallthru
    _

</llo_original>
